<compile_context>
chip_gen: v7x
topology: tpu7x:2x2x1
jax: 0.10.0
libtpu: 0.0.40
codegen_flags: <defaults>
</compile_context>

<pallas_src>
import functools

import jax
import jax.numpy as jnp
import numpy as np
from jax import lax
from jax.experimental import pallas as pl
from jax.experimental.pallas import tpu as pltpu


# ----------------------------------------------------------------------------
# small helpers
# ----------------------------------------------------------------------------
def _place_lanes(block, lane_off, total_lanes):
    """Embed `block` (rows, w) into a zero (rows, total_lanes) strip at lane offset."""
    rows, w = block.shape
    parts = []
    if lane_off > 0:
        parts.append(jnp.zeros((rows, lane_off), block.dtype))
    parts.append(block)
    rem = total_lanes - lane_off - w
    if rem > 0:
        parts.append(jnp.zeros((rows, rem), block.dtype))
    return parts[0] if len(parts) == 1 else jnp.concatenate(parts, axis=1)


def _full_spec(shape):
    nd = len(shape)
    return pl.BlockSpec(shape, lambda i, _nd=nd: (0,) * _nd)


# ----------------------------------------------------------------------------
# Fused forward kernel (single grid step handles the whole batch)
# ----------------------------------------------------------------------------
def _build_fused_kernel(*, n_layer, n_head, d_head, d_model, qlen, mlen, bsz,
                        n_token_pad, has_mems, loss_lanes):
    klen = mlen + qlen
    nh_dh = n_head * d_head
    G = bsz * n_head                     # number of (batch, head) groups packed along lanes
    eps = 1e-5
    neg_inf = -1e30
    f32 = jnp.float32
    bf16 = jnp.bfloat16

    def _ln(x, g, b):
        mu = jnp.mean(x, axis=-1, keepdims=True)
        xc = x - mu
        var = jnp.mean(xc * xc, axis=-1, keepdims=True)
        return xc * lax.rsqrt(var + eps) * g + b

    def kernel(*refs):
        if has_mems:
            (word_ref, pos_ref, mems_ref, tgt_ref, rwb_ref, rrb_ref, projw_ref,
             ow_ref, ln1g_ref, ln1b_ref, w1_ref, b1_ref, w2_ref, b2_ref,
             ln2g_ref, ln2b_ref, outw_ref, outb_ref, hids_ref, loss_ref) = refs
        else:
            (word_ref, pos_ref, tgt_ref, rwb_ref, rrb_ref, projw_ref,
             ow_ref, ln1g_ref, ln1b_ref, w1_ref, b1_ref, w2_ref, b2_ref,
             ln2g_ref, ln2b_ref, outw_ref, outb_ref, hids_ref, loss_ref) = refs
            mems_ref = None

        word = word_ref[...]                                  # (qlen, bsz*d_model)
        hids_ref[0] = word
        # batch rows stacked along sublanes: rows [b*qlen:(b+1)*qlen] = batch b
        core = jnp.concatenate(
            [word[:, b * d_model:(b + 1) * d_model] for b in range(bsz)], axis=0)

        pos = pos_ref[...]                                    # (klen, d_model)
        rwb = rwb_ref[...]                                    # (1, nh_dh), pre-scaled
        rrb = rrb_ref[...]

        # causal mask / iotas built in-kernel once (shared across layers)
        cols = lax.broadcasted_iota(jnp.int32, (qlen, klen), 1)
        cols_g = jnp.concatenate([cols] * G, axis=1)          # (qlen, G*klen)
        rows_g = lax.broadcasted_iota(jnp.int32, (qlen, G * klen), 0)
        mask_all = cols_g > rows_g + mlen

        for l in range(n_layer):
            mems_l = mems_ref[l] if has_mems else None

            # ---- fused qkv + r projection: one dot for all batch rows + positions
            xs = []
            for b in range(bsz):
                if has_mems:
                    xs.append(mems_l[:, b * d_model:(b + 1) * d_model])
                xs.append(core[b * qlen:(b + 1) * qlen])
            xs.append(pos)
            X = jnp.concatenate(xs, axis=0)                   # (bsz*klen + klen, d_model)
            P = jnp.dot(X.astype(bf16), projw_ref[l],
                        preferred_element_type=f32)           # (rows, 4*nh_dh)

            # ---- merged relative attention: ONE score dot for every (batch, head)
            # LHS A: lanes [0 : G*dh) = q+rwb per group, lanes [G*dh : 2*G*dh) = q+rrb.
            q_ac, q_bd = [], []
            for b in range(bsz):
                Qb = P[b * klen + mlen:(b + 1) * klen, 0:nh_dh]   # (qlen, nh_dh) pre-scaled
                q_ac.append(Qb + rwb)
                q_bd.append(Qb + rrb)
            A = jnp.concatenate(q_ac + q_bd, axis=1)          # (qlen, 2*G*dh)

            # RHS (output-major): row c is an output column, lanes are the contraction dim.
            strips = []
            for b in range(bsz):
                for h in range(n_head):
                    g = b * n_head + h
                    k_g = P[b * klen:(b + 1) * klen,
                            nh_dh + h * d_head:nh_dh + (h + 1) * d_head]
                    strips.append(_place_lanes(k_g, g * d_head, 2 * G * d_head))
            for b in range(bsz):
                for h in range(n_head):
                    g = b * n_head + h
                    rk_g = P[bsz * klen:bsz * klen + klen,
                             3 * nh_dh + h * d_head:3 * nh_dh + (h + 1) * d_head]
                    strips.append(_place_lanes(rk_g, G * d_head + g * d_head,
                                               2 * G * d_head))
            W_kr = jnp.concatenate(strips, axis=0)            # (2*G*klen, 2*G*dh)

            sc_raw = lax.dot_general(A.astype(bf16), W_kr.astype(bf16),
                                     (((1,), (1,)), ((), ())),
                                     preferred_element_type=f32)  # (qlen, 2*G*klen)
            ac_all = sc_raw[:, :G * klen]
            bd_all = sc_raw[:, G * klen:]

            # rel_shift: row i needs a left rotation by (qlen-1-i); the cyclic wrap only
            # lands on masked lanes, so one rotation of the whole (qlen, G*klen) row works.
            bd_shift = bd_all
            for s in range(1, qlen):
                rot = jnp.concatenate([bd_all[:, s:], bd_all[:, :s]], axis=1)
                bd_shift = jnp.where(rows_g == (qlen - 1 - s), rot, bd_shift)

            sc = jnp.where(mask_all, neg_inf, ac_all + bd_shift)

            # segmented softmax: one klen-lane group per (batch, head)
            probs = []
            for g in range(G):
                scg = sc[:, g * klen:(g + 1) * klen]
                m = jnp.max(scg, axis=-1, keepdims=True)
                e = jnp.exp(scg - m)
                ssum = jnp.sum(e, axis=-1, keepdims=True)
                probs.append(e * pl.reciprocal(ssum, approx=True))   # EUP slot
            p_all = jnp.concatenate(probs, axis=1)            # (qlen, G*klen)

            # ONE AV dot against a block-diagonal V
            vstrips = []
            for b in range(bsz):
                for h in range(n_head):
                    g = b * n_head + h
                    v_g = P[b * klen:(b + 1) * klen,
                            2 * nh_dh + h * d_head:2 * nh_dh + (h + 1) * d_head]
                    vstrips.append(_place_lanes(v_g, g * d_head, G * d_head))
            W_v = jnp.concatenate(vstrips, axis=0)            # (G*klen, G*dh)
            av_all = jnp.dot(p_all.astype(bf16), W_v.astype(bf16),
                             preferred_element_type=f32)      # (qlen, G*dh)
            av = jnp.concatenate(
                [av_all[:, b * nh_dh:(b + 1) * nh_dh] for b in range(bsz)],
                axis=0)                                       # (bsz*qlen, nh_dh)

            # ---- output projection + residual + LayerNorm (post-norm), batch stacked
            attn_out = jnp.dot(av.astype(bf16), ow_ref[l], preferred_element_type=f32)
            out1 = _ln(core + attn_out, ln1g_ref[l], ln1b_ref[l])

            # ---- position-wise FFN + residual + LayerNorm
            h1 = jnp.maximum(
                jnp.dot(out1.astype(bf16), w1_ref[l], preferred_element_type=f32)
                + b1_ref[l], 0.0)
            ff = jnp.dot(h1.astype(bf16), w2_ref[l], preferred_element_type=f32) + b2_ref[l]
            core = _ln(out1 + ff, ln2g_ref[l], ln2b_ref[l])

            hids_ref[l + 1] = jnp.concatenate(
                [core[b * qlen:(b + 1) * qlen] for b in range(bsz)], axis=1)

        # ---- tied-embedding logits (padded to 128 lanes) + NLL loss (lane-dense slab)
        logits = jnp.dot(core.astype(bf16), outw_ref[...],
                         preferred_element_type=f32) + outb_ref[...]
        vmax = jnp.max(logits, axis=-1, keepdims=True)
        lse = vmax + jnp.log(jnp.sum(jnp.exp(logits - vmax), axis=-1, keepdims=True))
        ids = lax.broadcasted_iota(jnp.int32, (bsz * qlen, n_token_pad), 1)
        tgt = tgt_ref[...]                                    # (qlen, bsz) int32
        tgt_stack = jnp.concatenate([tgt[:, b:b + 1] for b in range(bsz)], axis=0)
        picked = jnp.sum(jnp.where(ids == tgt_stack, logits, 0.0), axis=-1, keepdims=True)
        loss_stack = lse - picked                             # (bsz*qlen, 1)
        loss_cols = jnp.concatenate(
            [loss_stack[b * qlen:(b + 1) * qlen] for b in range(bsz)], axis=1)
        loss_ref[...] = jnp.concatenate(
            [loss_cols, jnp.zeros((qlen, loss_lanes - bsz), f32)], axis=1)

    return kernel


# ----------------------------------------------------------------------------
# Forward wrapper (equivalent of MemTransformerLM.forward(data, target, None, mems))
# ----------------------------------------------------------------------------
def mem_transformer_forward(params, data, target, mems, cfg):
    n_layer = cfg['n_layer']; n_head = cfg['n_head']
    d_model = cfg['d_model']; d_head = cfg['d_head']
    n_token = cfg['n_token']; mem_len = cfg['mem_len']

    qlen, bsz = data.shape
    mlen = 0 if mems is None else mems.shape[1]
    klen = mlen + qlen
    nh_dh = n_head * d_head
    emb_scale = float(d_model) ** 0.5
    attn_scale = 1.0 / float(d_head) ** 0.5
    n_token_pad = ((n_token + 127) // 128) * 128
    loss_lanes = 128
    f32, bf16 = jnp.float32, jnp.bfloat16

    # AdaptiveEmbedding (d_proj == d_embed): row gather; stays seq-major (no transposes).
    word = (jnp.take(params['emb_weight'], data, axis=0) * emb_scale).astype(f32)
    word = word.reshape(qlen, bsz * d_model)

    # PositionalEmbedding (clamp_len <= 0)
    pos_seq = jnp.arange(klen - 1, -1, -1, dtype=f32)
    inv_freq = 1.0 / (10000.0 ** (jnp.arange(0, d_model, 2, dtype=f32) / d_model))
    sinusoid = pos_seq[:, None] * inv_freq[None, :]
    pos_emb = jnp.concatenate([jnp.sin(sinusoid), jnp.cos(sinusoid)], axis=-1)

    tgt = target.astype(jnp.int32)                            # (qlen, bsz)

    # attention scale folded once into the Q columns of the fused projection + the biases
    proj_w = params['proj_w'].astype(f32)
    proj_w = jnp.concatenate(
        [proj_w[:, :, :nh_dh] * attn_scale, proj_w[:, :, nh_dh:]], axis=-1).astype(bf16)
    rwb = (params['r_w_bias'].reshape(1, nh_dh) * attn_scale).astype(f32)
    rrb = (params['r_r_bias'].reshape(1, nh_dh) * attn_scale).astype(f32)

    # Tied output projection, padded to 128 lanes (padding classes get a -1e30 bias).
    out_w_pad = jnp.zeros((d_model, n_token_pad), f32)
    out_w_pad = out_w_pad.at[:, :n_token].set(params['emb_weight'].T.astype(f32))
    out_w_pad = out_w_pad.astype(bf16)
    out_b_pad = jnp.full((1, n_token_pad), -1e30, f32)
    out_b_pad = out_b_pad.at[0, :n_token].set(params['out_bias'].astype(f32))

    args = [word, pos_emb]
    if mems is not None:
        args.append(mems.astype(f32).reshape(n_layer + 1, mlen, bsz * d_model))
    args += [
        tgt, rwb, rrb, proj_w,
        params['o_w'].astype(bf16),
        params['ln1_g'].astype(f32), params['ln1_b'].astype(f32),
        params['ff_w1'].astype(bf16), params['ff_b1'].astype(f32),
        params['ff_w2'].astype(bf16), params['ff_b2'].astype(f32),
        params['ln2_g'].astype(f32), params['ln2_b'].astype(f32),
        out_w_pad, out_b_pad,
    ]

    kernel = _build_fused_kernel(
        n_layer=n_layer, n_head=n_head, d_head=d_head, d_model=d_model,
        qlen=qlen, mlen=mlen, bsz=bsz, n_token_pad=n_token_pad,
        has_mems=mems is not None, loss_lanes=loss_lanes)

    hids, loss_pad = pl.pallas_call(
        kernel,
        out_shape=(jax.ShapeDtypeStruct((n_layer + 1, qlen, bsz * d_model), f32),
                   jax.ShapeDtypeStruct((qlen, loss_lanes), f32)),
        grid=(1,),
        in_specs=[_full_spec(a.shape) for a in args],
        out_specs=(_full_spec((n_layer + 1, qlen, bsz * d_model)),
                   _full_spec((qlen, loss_lanes))),
        compiler_params=pltpu.CompilerParams(dimension_semantics=("arbitrary",)),
    )(*args)

    loss = loss_pad[:, :bsz]                                   # (qlen, bsz)
    hids_4d = hids.reshape(n_layer + 1, qlen, bsz, d_model)    # reshape only, no transpose

    # _update_mems: with mem_len == qlen the new memories are exactly the fresh hiddens.
    if mem_len == qlen:
        new_mems = lax.stop_gradient(hids_4d)
    else:
        cat = hids_4d if mems is None else jnp.concatenate([mems, hids_4d], axis=1)
        end_idx = mlen + qlen
        beg_idx = max(0, end_idx - mem_len)
        new_mems = lax.stop_gradient(cat[:, beg_idx:end_idx])
    return loss, new_mems


# ----------------------------------------------------------------------------
# Pure-JAX reference (mirrors the PyTorch module, dropout=0, pre_lnorm=False)
# ----------------------------------------------------------------------------
def _layernorm(x, g, b, eps=1e-5):
    mu = jnp.mean(x, axis=-1, keepdims=True)
    xc = x - mu
    var = jnp.mean(xc * xc, axis=-1, keepdims=True)
    return xc * lax.rsqrt(var + eps) * g + b


def _rel_shift_ref(x):
    b, n, q, r = x.shape
    zp = jnp.zeros((b, n, q, 1), x.dtype)
    xp = jnp.concatenate([zp, x], axis=3).reshape(b, n, r + 1, q)
    return xp[:, :, 1:, :].reshape(b, n, q, r)


def reference_forward(params, data, target, mems, cfg):
    hp = lax.Precision.HIGHEST
    mm = functools.partial(jnp.dot, precision=hp)
    n_layer = cfg['n_layer']; n_head = cfg['n_head']
    d_model = cfg['d_model']; d_head = cfg['d_head']
    mem_len = cfg['mem_len']
    qlen, bsz = data.shape
    mlen = 0 if mems is None else mems.shape[1]
    klen = mlen + qlen
    scale = 1.0 / float(d_head) ** 0.5
    nh_dh = n_head * d_head

    word_emb = jnp.take(params['emb_weight'], data, axis=0) * (float(d_model) ** 0.5)
    mask = jnp.triu(jnp.ones((qlen, klen), bool), k=1 + mlen)
    pos_seq = jnp.arange(klen - 1, -1, -1, dtype=jnp.float32)
    inv_freq = 1.0 / (10000.0 ** (jnp.arange(0, d_model, 2, dtype=jnp.float32) / d_model))
    sinusoid = pos_seq[:, None] * inv_freq[None, :]
    pos_emb = jnp.concatenate([jnp.sin(sinusoid), jnp.cos(sinusoid)], axis=-1)

    core = word_emb
    hids = [core]
    for l in range(n_layer):
        mems_l = None if mems is None else mems[l]
        cat = core if mems_l is None else jnp.concatenate([mems_l, core], axis=0)
        projw = params['proj_w'][l]
        qkv_w, r_w = projw[:, :3 * nh_dh], projw[:, 3 * nh_dh:]
        w_heads = mm(cat.reshape(-1, d_model), qkv_w).reshape(klen, bsz, 3, n_head, d_head)
        q = w_heads[:, :, 0][-qlen:]
        k = w_heads[:, :, 1]
        v = w_heads[:, :, 2]
        r_k = mm(pos_emb, r_w).reshape(klen, n_head, d_head)
        ac = jnp.einsum('ibnd,jbnd->bnij', q + params['r_w_bias'], k, precision=hp)
        bd = _rel_shift_ref(jnp.einsum('ibnd,jnd->bnij', q + params['r_r_bias'], r_k,
                                       precision=hp))
        score = (ac + bd) * scale
        score = jnp.where(mask[None, None], -jnp.inf, score)
        prob = jax.nn.softmax(score, axis=-1)
        av = jnp.einsum('bnij,jbnd->ibnd', prob, v, precision=hp).reshape(qlen * bsz, nh_dh)
        attn_out = mm(av, params['o_w'][l])
        out1 = _layernorm(core.reshape(-1, d_model) + attn_out,
                          params['ln1_g'][l], params['ln1_b'][l])
        h1 = jnp.maximum(mm(out1, params['ff_w1'][l]) + params['ff_b1'][l], 0.0)
        ff = mm(h1, params['ff_w2'][l]) + params['ff_b2'][l]
        core = _layernorm(out1 + ff, params['ln2_g'][l], params['ln2_b'][l]).reshape(
            qlen, bsz, d_model)
        hids.append(core)

    stacked = jnp.stack(hids)
    cat = stacked if mems is None else jnp.concatenate([mems, stacked], axis=1)
    end_idx = mlen + qlen
    beg_idx = max(0, end_idx - mem_len)
    new_mems = cat[:, beg_idx:end_idx]

    pred = core.reshape(-1, d_model)
    logits = mm(pred, params['emb_weight'].T) + params['out_bias']
    lse = jax.scipy.special.logsumexp(logits, axis=-1)
    picked = jnp.take_along_axis(logits, target.reshape(-1, 1), axis=-1)[:, 0]
    loss = (lse - picked).reshape(qlen, bsz)
    return loss, new_mems


# ----------------------------------------------------------------------------
# Deterministic parameter init (synthetic; qkv and r projections pre-concatenated)
# ----------------------------------------------------------------------------
def init_params(key, n_layer, n_head, d_model, d_head, d_inner, n_token):
    def nrm(k, shape, s=0.02):
        return jax.random.normal(k, shape, jnp.float32) * s

    nh_dh = n_head * d_head
    keys = jax.random.split(key, 10)
    return {
        'emb_weight': nrm(keys[0], (n_token, d_model), 0.1),
        'r_w_bias': nrm(keys[1], (n_head, d_head)),
        'r_r_bias': nrm(keys[2], (n_head, d_head)),
        'out_bias': nrm(keys[3], (n_token,)),
        # per-layer weights stacked on a leading layer axis; [qkv | r] concatenated so the
        # fused projection output is exactly 4*n_head*d_head = 128 lanes wide.
        'proj_w': nrm(keys[4], (n_layer, d_model, 4 * nh_dh)),
        'o_w': nrm(keys[5], (n_layer, nh_dh, d_model)),
        'ln1_g': jnp.ones((n_layer, 1, d_model), jnp.float32),
        'ln1_b': jnp.zeros((n_layer, 1, d_model), jnp.float32),
        'ff_w1': nrm(keys[6], (n_layer, d_model, d_inner)),
        'ff_b1': nrm(keys[7], (n_layer, 1, d_inner)),
        'ff_w2': nrm(keys[8], (n_layer, d_inner, d_model)),
        'ff_b2': nrm(keys[9], (n_layer, 1, d_model)),
        'ln2_g': jnp.ones((n_layer, 1, d_model), jnp.float32),
        'ln2_b': jnp.zeros((n_layer, 1, d_model), jnp.float32),
    }


if __name__ == "__main__":
    n_layer, n_head, d_model, d_inner, n_token = 2, 2, 32, 64, 40
    d_head = d_model // n_head
    tgt_len, mem_len, bsz = 8, 8, 2
    cfg = dict(n_layer=n_layer, n_head=n_head, d_model=d_model, d_head=d_head,
               d_inner=d_inner, n_token=n_token, mem_len=mem_len)

    key = jax.random.PRNGKey(0)
    pkey, dkey, tkey, d2key, t2key = jax.random.split(key, 5)
    params = init_params(pkey, n_layer, n_head, d_model, d_head, d_inner, n_token)

    data = jax.random.randint(dkey, (tgt_len, bsz), 0, n_token, dtype=jnp.int32)
    target = jax.random.randint(tkey, (tgt_len, bsz), 0, n_token, dtype=jnp.int32)
    data2 = jax.random.randint(d2key, (tgt_len, bsz), 0, n_token, dtype=jnp.int32)
    target2 = jax.random.randint(t2key, (tgt_len, bsz), 0, n_token, dtype=jnp.int32)

    fwd = jax.jit(functools.partial(mem_transformer_forward, cfg=cfg))

    # step 1: empty memory (mems=None, matches init_mems with numel() == 0)
    loss1, mems1 = fwd(params, data, target, None)
    jax.block_until_ready((loss1, mems1))

    # step 2: feed cached memories back (mlen = mem_len)
    loss2, mems2 = fwd(params, data2, target2, mems1)
    jax.block_until_ready((loss2, mems2))

    assert loss1.shape == (tgt_len, bsz) and loss2.shape == (tgt_len, bsz)
    assert mems1.shape == (n_layer + 1, mem_len, bsz, d_model)
    assert mems2.shape == (n_layer + 1, mem_len, bsz, d_model)
    assert bool(jnp.all(jnp.isfinite(loss1))) and bool(jnp.all(jnp.isfinite(loss2)))

    # numerical check against a pure-JAX (f32 HIGHEST-precision) mirror of the PyTorch
    # forward.  The kernel uses bf16 MXU operands + approx reciprocal, hence 2e-2 tol.
    ref_loss1, ref_mems1 = reference_forward(params, data, target, None, cfg)
    ref_loss2, ref_mems2 = reference_forward(params, data2, target2, mems1, cfg)
    np.testing.assert_allclose(np.asarray(loss1), np.asarray(ref_loss1), rtol=2e-2, atol=2e-2)
    np.testing.assert_allclose(np.asarray(mems1), np.asarray(ref_mems1), rtol=2e-2, atol=2e-2)
    np.testing.assert_allclose(np.asarray(loss2), np.asarray(ref_loss2), rtol=2e-2, atol=2e-2)
    np.testing.assert_allclose(np.asarray(mems2), np.asarray(ref_mems2), rtol=2e-2, atol=2e-2)

    print("KERNEL_OK")
</pallas_src>

<mosaic_0001>
module attributes {stable_mosaic.version = 11 : i64} {
  func.func @kernel(%arg0: i32, %arg1: memref<8x64xf32, #tpu.memory_space<vmem>>, %arg2: memref<8x32xf32, #tpu.memory_space<vmem>>, %arg3: memref<8x2xi32, #tpu.memory_space<vmem>>, %arg4: memref<1x32xf32, #tpu.memory_space<vmem>>, %arg5: memref<1x32xf32, #tpu.memory_space<vmem>>, %arg6: memref<2x32x128xbf16, #tpu.memory_space<vmem>>, %arg7: memref<2x32x32xbf16, #tpu.memory_space<vmem>>, %arg8: memref<2x1x32xf32, #tpu.memory_space<vmem>>, %arg9: memref<2x1x32xf32, #tpu.memory_space<vmem>>, %arg10: memref<2x32x64xbf16, #tpu.memory_space<vmem>>, %arg11: memref<2x1x64xf32, #tpu.memory_space<vmem>>, %arg12: memref<2x64x32xbf16, #tpu.memory_space<vmem>>, %arg13: memref<2x1x32xf32, #tpu.memory_space<vmem>>, %arg14: memref<2x1x32xf32, #tpu.memory_space<vmem>>, %arg15: memref<2x1x32xf32, #tpu.memory_space<vmem>>, %arg16: memref<32x128xbf16, #tpu.memory_space<vmem>>, %arg17: memref<1x128xf32, #tpu.memory_space<vmem>>, %arg18: memref<3x8x64xf32, #tpu.memory_space<vmem>>, %arg19: memref<8x128xf32, #tpu.memory_space<vmem>>) attributes {dimension_semantics = [#tpu.dimension_semantics<arbitrary>], iteration_bounds = array<i64: 1>, scalar_prefetch = 0 : i64, scratch_operands = 0 : i64, tpu.core_type = #tpu.core_type<tc>, window_params = [{pipeline_mode = #tpu.pipeline_mode<synchronous>, transform_indices = @transform_0, window_bounds = array<i64: 8, 64>}, {pipeline_mode = #tpu.pipeline_mode<synchronous>, transform_indices = @transform_1, window_bounds = array<i64: 8, 32>}, {pipeline_mode = #tpu.pipeline_mode<synchronous>, transform_indices = @transform_2, window_bounds = array<i64: 8, 2>}, {pipeline_mode = #tpu.pipeline_mode<synchronous>, transform_indices = @transform_3, window_bounds = array<i64: 1, 32>}, {pipeline_mode = #tpu.pipeline_mode<synchronous>, transform_indices = @transform_4, window_bounds = array<i64: 1, 32>}, {pipeline_mode = #tpu.pipeline_mode<synchronous>, transform_indices = @transform_5, window_bounds = array<i64: 2, 32, 128>}, {pipeline_mode = #tpu.pipeline_mode<synchronous>, transform_indices = @transform_6, window_bounds = array<i64: 2, 32, 32>}, {pipeline_mode = #tpu.pipeline_mode<synchronous>, transform_indices = @transform_7, window_bounds = array<i64: 2, 1, 32>}, {pipeline_mode = #tpu.pipeline_mode<synchronous>, transform_indices = @transform_8, window_bounds = array<i64: 2, 1, 32>}, {pipeline_mode = #tpu.pipeline_mode<synchronous>, transform_indices = @transform_9, window_bounds = array<i64: 2, 32, 64>}, {pipeline_mode = #tpu.pipeline_mode<synchronous>, transform_indices = @transform_10, window_bounds = array<i64: 2, 1, 64>}, {pipeline_mode = #tpu.pipeline_mode<synchronous>, transform_indices = @transform_11, window_bounds = array<i64: 2, 64, 32>}, {pipeline_mode = #tpu.pipeline_mode<synchronous>, transform_indices = @transform_12, window_bounds = array<i64: 2, 1, 32>}, {pipeline_mode = #tpu.pipeline_mode<synchronous>, transform_indices = @transform_13, window_bounds = array<i64: 2, 1, 32>}, {pipeline_mode = #tpu.pipeline_mode<synchronous>, transform_indices = @transform_14, window_bounds = array<i64: 2, 1, 32>}, {pipeline_mode = #tpu.pipeline_mode<synchronous>, transform_indices = @transform_15, window_bounds = array<i64: 32, 128>}, {pipeline_mode = #tpu.pipeline_mode<synchronous>, transform_indices = @transform_16, window_bounds = array<i64: 1, 128>}, {pipeline_mode = #tpu.pipeline_mode<synchronous>, transform_indices = @transform_17, window_bounds = array<i64: 3, 8, 64>}, {pipeline_mode = #tpu.pipeline_mode<synchronous>, transform_indices = @transform_18, window_bounds = array<i64: 8, 128>}]} {
    %c0 = arith.constant 0 : index
    %c0_0 = arith.constant 0 : index
    %0 = vector.load %arg1[%c0, %c0_0] : memref<8x64xf32, #tpu.memory_space<vmem>>, vector<8x64xf32>
    %c0_1 = arith.constant 0 : index
    %c0_2 = arith.constant 0 : index
    %c0_3 = arith.constant 0 : index
    %1 = vector.load %arg18[%c0_1, %c0_2, %c0_3] : memref<3x8x64xf32, #tpu.memory_space<vmem>>, vector<1x8x64xf32>
    %2 = vector.shape_cast %1 : vector<1x8x64xf32> to vector<8x64xf32>
    %3 = vector.shape_cast %0 : vector<8x64xf32> to vector<1x8x64xf32>
    tpu.vector_store %arg18[%c0_1, %c0_2, %c0_3], %3 {strides = array<i32>} : memref<3x8x64xf32, #tpu.memory_space<vmem>>, vector<1x8x64xf32>,
    %4 = vector.extract_strided_slice %0 {offsets = [0, 0], sizes = [8, 32], strides = [1, 1]} : vector<8x64xf32> to vector<8x32xf32>
    %5 = vector.extract_strided_slice %0 {offsets = [0, 32], sizes = [8, 32], strides = [1, 1]} : vector<8x64xf32> to vector<8x32xf32>
    %6 = tpu.concatenate %4, %5 in 0 : vector<8x32xf32>, vector<8x32xf32> -> vector<16x32xf32>
    %c0_4 = arith.constant 0 : index
    %c0_5 = arith.constant 0 : index
    %7 = vector.load %arg2[%c0_4, %c0_5] : memref<8x32xf32, #tpu.memory_space<vmem>>, vector<8x32xf32>
    %c0_6 = arith.constant 0 : index
    %c0_7 = arith.constant 0 : index
    %8 = vector.load %arg4[%c0_6, %c0_7] : memref<1x32xf32, #tpu.memory_space<vmem>>, vector<1x32xf32>
    %c0_8 = arith.constant 0 : index
    %c0_9 = arith.constant 0 : index
    %9 = vector.load %arg5[%c0_8, %c0_9] : memref<1x32xf32, #tpu.memory_space<vmem>>, vector<1x32xf32>
    %10 = tpu.iota {dimensions = array<i32: 1>} : vector<8x8xi32>
    %11 = tpu.concatenate %10, %10, %10, %10 in 1 : vector<8x8xi32>, vector<8x8xi32>, vector<8x8xi32>, vector<8x8xi32> -> vector<8x32xi32>
    %12 = tpu.iota {dimensions = array<i32: 0>} : vector<8x32xi32>
    %c0_i32 = arith.constant 0 : i32
    %13 = vector.broadcast %c0_i32 : i32 to vector<8x32xi32>
    %14 = arith.addi %12, %13 : vector<8x32xi32>
    %15 = arith.cmpi sgt, %11, %14 : vector<8x32xi32>
    %16 = vector.extract_strided_slice %6 {offsets = [0, 0], sizes = [8, 32], strides = [1, 1]} : vector<16x32xf32> to vector<8x32xf32>
    %17 = vector.extract_strided_slice %6 {offsets = [8, 0], sizes = [8, 32], strides = [1, 1]} : vector<16x32xf32> to vector<8x32xf32>
    %18 = tpu.concatenate %16, %17, %7 in 0 : vector<8x32xf32>, vector<8x32xf32>, vector<8x32xf32> -> vector<24x32xf32>
    %19 = arith.truncf %18 : vector<24x32xf32> to vector<24x32xbf16>
    %c0_10 = arith.constant 0 : index
    %c0_11 = arith.constant 0 : index
    %c0_12 = arith.constant 0 : index
    %20 = vector.load %arg6[%c0_10, %c0_11, %c0_12] : memref<2x32x128xbf16, #tpu.memory_space<vmem>>, vector<1x32x128xbf16>
    %21 = vector.shape_cast %20 : vector<1x32x128xbf16> to vector<32x128xbf16>
    %cst = arith.constant dense<0.000000e+00> : vector<24x128xf32>
    %22 = tpu.matmul %19, %21, %cst {dimension_numbers = #tpu.dot_dimension_numbers<[1], [0], [0], [1], [0, 0, 1, 1], [], []>} : vector<24x32xbf16>, vector<32x128xbf16>, vector<24x128xf32> -> vector<24x128xf32>
    %23 = vector.extract_strided_slice %22 {offsets = [0, 0], sizes = [8, 32], strides = [1, 1]} : vector<24x128xf32> to vector<8x32xf32>
    %24 = vector.broadcast %8 : vector<1x32xf32> to vector<8x32xf32>
    %25 = arith.addf %23, %24 : vector<8x32xf32>
    %26 = vector.broadcast %9 : vector<1x32xf32> to vector<8x32xf32>
    %27 = arith.addf %23, %26 : vector<8x32xf32>
    %28 = vector.extract_strided_slice %22 {offsets = [8, 0], sizes = [8, 32], strides = [1, 1]} : vector<24x128xf32> to vector<8x32xf32>
    %29 = vector.broadcast %8 : vector<1x32xf32> to vector<8x32xf32>
    %30 = arith.addf %28, %29 : vector<8x32xf32>
    %31 = vector.broadcast %9 : vector<1x32xf32> to vector<8x32xf32>
    %32 = arith.addf %28, %31 : vector<8x32xf32>
    %33 = tpu.concatenate %25, %30, %27, %32 in 1 : vector<8x32xf32>, vector<8x32xf32>, vector<8x32xf32>, vector<8x32xf32> -> vector<8x128xf32>
    %34 = vector.extract_strided_slice %22 {offsets = [0, 32], sizes = [8, 16], strides = [1, 1]} : vector<24x128xf32> to vector<8x16xf32>
    %cst_13 = arith.constant 0.000000e+00 : f32
    %35 = vector.broadcast %cst_13 : f32 to vector<8x112xf32>
    %36 = tpu.concatenate %34, %35 in 1 : vector<8x16xf32>, vector<8x112xf32> -> vector<8x128xf32>
    %37 = vector.extract_strided_slice %22 {offsets = [0, 48], sizes = [8, 16], strides = [1, 1]} : vector<24x128xf32> to vector<8x16xf32>
    %cst_14 = arith.constant 0.000000e+00 : f32
    %38 = vector.broadcast %cst_14 : f32 to vector<8x16xf32>
    %cst_15 = arith.constant 0.000000e+00 : f32
    %39 = vector.broadcast %cst_15 : f32 to vector<8x96xf32>
    %40 = tpu.concatenate %38, %37, %39 in 1 : vector<8x16xf32>, vector<8x16xf32>, vector<8x96xf32> -> vector<8x128xf32>
    %41 = vector.extract_strided_slice %22 {offsets = [8, 32], sizes = [8, 16], strides = [1, 1]} : vector<24x128xf32> to vector<8x16xf32>
    %cst_16 = arith.constant 0.000000e+00 : f32
    %42 = vector.broadcast %cst_16 : f32 to vector<8x32xf32>
    %cst_17 = arith.constant 0.000000e+00 : f32
    %43 = vector.broadcast %cst_17 : f32 to vector<8x80xf32>
    %44 = tpu.concatenate %42, %41, %43 in 1 : vector<8x32xf32>, vector<8x16xf32>, vector<8x80xf32> -> vector<8x128xf32>
    %45 = vector.extract_strided_slice %22 {offsets = [8, 48], sizes = [8, 16], strides = [1, 1]} : vector<24x128xf32> to vector<8x16xf32>
    %cst_18 = arith.constant 0.000000e+00 : f32
    %46 = vector.broadcast %cst_18 : f32 to vector<8x48xf32>
    %cst_19 = arith.constant 0.000000e+00 : f32
    %47 = vector.broadcast %cst_19 : f32 to vector<8x64xf32>
    %48 = tpu.concatenate %46, %45, %47 in 1 : vector<8x48xf32>, vector<8x16xf32>, vector<8x64xf32> -> vector<8x128xf32>
    %49 = vector.extract_strided_slice %22 {offsets = [16, 96], sizes = [8, 16], strides = [1, 1]} : vector<24x128xf32> to vector<8x16xf32>
    %cst_20 = arith.constant 0.000000e+00 : f32
    %50 = vector.broadcast %cst_20 : f32 to vector<8x64xf32>
    %cst_21 = arith.constant 0.000000e+00 : f32
    %51 = vector.broadcast %cst_21 : f32 to vector<8x48xf32>
    %52 = tpu.concatenate %50, %49, %51 in 1 : vector<8x64xf32>, vector<8x16xf32>, vector<8x48xf32> -> vector<8x128xf32>
    %53 = vector.extract_strided_slice %22 {offsets = [16, 112], sizes = [8, 16], strides = [1, 1]} : vector<24x128xf32> to vector<8x16xf32>
    %cst_22 = arith.constant 0.000000e+00 : f32
    %54 = vector.broadcast %cst_22 : f32 to vector<8x80xf32>
    %cst_23 = arith.constant 0.000000e+00 : f32
    %55 = vector.broadcast %cst_23 : f32 to vector<8x32xf32>
    %56 = tpu.concatenate %54, %53, %55 in 1 : vector<8x80xf32>, vector<8x16xf32>, vector<8x32xf32> -> vector<8x128xf32>
    %57 = vector.extract_strided_slice %22 {offsets = [16, 96], sizes = [8, 16], strides = [1, 1]} : vector<24x128xf32> to vector<8x16xf32>
    %cst_24 = arith.constant 0.000000e+00 : f32
    %58 = vector.broadcast %cst_24 : f32 to vector<8x96xf32>
    %cst_25 = arith.constant 0.000000e+00 : f32
    %59 = vector.broadcast %cst_25 : f32 to vector<8x16xf32>
    %60 = tpu.concatenate %58, %57, %59 in 1 : vector<8x96xf32>, vector<8x16xf32>, vector<8x16xf32> -> vector<8x128xf32>
    %61 = vector.extract_strided_slice %22 {offsets = [16, 112], sizes = [8, 16], strides = [1, 1]} : vector<24x128xf32> to vector<8x16xf32>
    %cst_26 = arith.constant 0.000000e+00 : f32
    %62 = vector.broadcast %cst_26 : f32 to vector<8x112xf32>
    %63 = tpu.concatenate %62, %61 in 1 : vector<8x112xf32>, vector<8x16xf32> -> vector<8x128xf32>
    %64 = tpu.concatenate %36, %40, %44, %48, %52, %56, %60, %63 in 0 : vector<8x128xf32>, vector<8x128xf32>, vector<8x128xf32>, vector<8x128xf32>, vector<8x128xf32>, vector<8x128xf32>, vector<8x128xf32>, vector<8x128xf32> -> vector<64x128xf32>
    %65 = arith.truncf %33 : vector<8x128xf32> to vector<8x128xbf16>
    %66 = arith.truncf %64 : vector<64x128xf32> to vector<64x128xbf16>
    %cst_27 = arith.constant dense<0.000000e+00> : vector<8x64xf32>
    %67 = tpu.matmul %65, %66, %cst_27 {dimension_numbers = #tpu.dot_dimension_numbers<[1], [1], [0], [0], [0, 0, 1, 0], [], []>} : vector<8x128xbf16>, vector<64x128xbf16>, vector<8x64xf32> -> vector<8x64xf32>
    %68 = vector.extract_strided_slice %67 {offsets = [0, 0], sizes = [8, 32], strides = [1, 1]} : vector<8x64xf32> to vector<8x32xf32>
    %69 = vector.extract_strided_slice %67 {offsets = [0, 32], sizes = [8, 32], strides = [1, 1]} : vector<8x64xf32> to vector<8x32xf32>
    %70 = vector.extract_strided_slice %69 {offsets = [0, 1], sizes = [8, 31], strides = [1, 1]} : vector<8x32xf32> to vector<8x31xf32>
    %71 = vector.extract_strided_slice %69 {offsets = [0, 0], sizes = [8, 1], strides = [1, 1]} : vector<8x32xf32> to vector<8x1xf32>
    %72 = tpu.concatenate %70, %71 in 1 : vector<8x31xf32>, vector<8x1xf32> -> vector<8x32xf32>
    %c6_i32 = arith.constant 6 : i32
    %73 = vector.broadcast %c6_i32 : i32 to vector<8x32xi32>
    %74 = arith.cmpi eq, %12, %73 : vector<8x32xi32>
    %75 = arith.select %74, %72, %69 : vector<8x32xi1>, vector<8x32xf32>
    %76 = vector.extract_strided_slice %69 {offsets = [0, 2], sizes = [8, 30], strides = [1, 1]} : vector<8x32xf32> to vector<8x30xf32>
    %77 = vector.extract_strided_slice %69 {offsets = [0, 0], sizes = [8, 2], strides = [1, 1]} : vector<8x32xf32> to vector<8x2xf32>
    %78 = tpu.concatenate %76, %77 in 1 : vector<8x30xf32>, vector<8x2xf32> -> vector<8x32xf32>
    %c5_i32 = arith.constant 5 : i32
    %79 = vector.broadcast %c5_i32 : i32 to vector<8x32xi32>
    %80 = arith.cmpi eq, %12, %79 : vector<8x32xi32>
    %81 = arith.select %80, %78, %75 : vector<8x32xi1>, vector<8x32xf32>
    %82 = vector.extract_strided_slice %69 {offsets = [0, 3], sizes = [8, 29], strides = [1, 1]} : vector<8x32xf32> to vector<8x29xf32>
    %83 = vector.extract_strided_slice %69 {offsets = [0, 0], sizes = [8, 3], strides = [1, 1]} : vector<8x32xf32> to vector<8x3xf32>
    %84 = tpu.concatenate %82, %83 in 1 : vector<8x29xf32>, vector<8x3xf32> -> vector<8x32xf32>
    %c4_i32 = arith.constant 4 : i32
    %85 = vector.broadcast %c4_i32 : i32 to vector<8x32xi32>
    %86 = arith.cmpi eq, %12, %85 : vector<8x32xi32>
    %87 = arith.select %86, %84, %81 : vector<8x32xi1>, vector<8x32xf32>
    %88 = vector.extract_strided_slice %69 {offsets = [0, 4], sizes = [8, 28], strides = [1, 1]} : vector<8x32xf32> to vector<8x28xf32>
    %89 = vector.extract_strided_slice %69 {offsets = [0, 0], sizes = [8, 4], strides = [1, 1]} : vector<8x32xf32> to vector<8x4xf32>
    %90 = tpu.concatenate %88, %89 in 1 : vector<8x28xf32>, vector<8x4xf32> -> vector<8x32xf32>
    %c3_i32 = arith.constant 3 : i32
    %91 = vector.broadcast %c3_i32 : i32 to vector<8x32xi32>
    %92 = arith.cmpi eq, %12, %91 : vector<8x32xi32>
    %93 = arith.select %92, %90, %87 : vector<8x32xi1>, vector<8x32xf32>
    %94 = vector.extract_strided_slice %69 {offsets = [0, 5], sizes = [8, 27], strides = [1, 1]} : vector<8x32xf32> to vector<8x27xf32>
    %95 = vector.extract_strided_slice %69 {offsets = [0, 0], sizes = [8, 5], strides = [1, 1]} : vector<8x32xf32> to vector<8x5xf32>
    %96 = tpu.concatenate %94, %95 in 1 : vector<8x27xf32>, vector<8x5xf32> -> vector<8x32xf32>
    %c2_i32 = arith.constant 2 : i32
    %97 = vector.broadcast %c2_i32 : i32 to vector<8x32xi32>
    %98 = arith.cmpi eq, %12, %97 : vector<8x32xi32>
    %99 = arith.select %98, %96, %93 : vector<8x32xi1>, vector<8x32xf32>
    %100 = vector.extract_strided_slice %69 {offsets = [0, 6], sizes = [8, 26], strides = [1, 1]} : vector<8x32xf32> to vector<8x26xf32>
    %101 = vector.extract_strided_slice %69 {offsets = [0, 0], sizes = [8, 6], strides = [1, 1]} : vector<8x32xf32> to vector<8x6xf32>
    %102 = tpu.concatenate %100, %101 in 1 : vector<8x26xf32>, vector<8x6xf32> -> vector<8x32xf32>
    %c1_i32 = arith.constant 1 : i32
    %103 = vector.broadcast %c1_i32 : i32 to vector<8x32xi32>
    %104 = arith.cmpi eq, %12, %103 : vector<8x32xi32>
    %105 = arith.select %104, %102, %99 : vector<8x32xi1>, vector<8x32xf32>
    %106 = vector.extract_strided_slice %69 {offsets = [0, 7], sizes = [8, 25], strides = [1, 1]} : vector<8x32xf32> to vector<8x25xf32>
    %107 = vector.extract_strided_slice %69 {offsets = [0, 0], sizes = [8, 7], strides = [1, 1]} : vector<8x32xf32> to vector<8x7xf32>
    %108 = tpu.concatenate %106, %107 in 1 : vector<8x25xf32>, vector<8x7xf32> -> vector<8x32xf32>
    %c0_i32_28 = arith.constant 0 : i32
    %109 = vector.broadcast %c0_i32_28 : i32 to vector<8x32xi32>
    %110 = arith.cmpi eq, %12, %109 : vector<8x32xi32>
    %111 = arith.select %110, %108, %105 : vector<8x32xi1>, vector<8x32xf32>
    %112 = arith.addf %68, %111 : vector<8x32xf32>
    %cst_29 = arith.constant -1.000000e+30 : f32
    %113 = vector.broadcast %cst_29 : f32 to vector<8x32xf32>
    %114 = arith.select %15, %113, %112 : vector<8x32xi1>, vector<8x32xf32>
    %115 = vector.extract_strided_slice %114 {offsets = [0, 0], sizes = [8, 8], strides = [1, 1]} : vector<8x32xf32> to vector<8x8xf32>
    %cst_30 = arith.constant dense<0xFF800000> : vector<8xf32>
    %116 = vector.multi_reduction <maximumf>, %115, %cst_30 [1] : vector<8x8xf32> to vector<8xf32>
    %117 = vector.shape_cast %116 : vector<8xf32> to vector<8x1xf32>
    %118 = vector.broadcast %117 : vector<8x1xf32> to vector<8x8xf32>
    %119 = arith.subf %115, %118 : vector<8x8xf32>
    %120 = math.exp %119 : vector<8x8xf32>
    %cst_31 = arith.constant dense<0.000000e+00> : vector<8xf32>
    %121 = vector.multi_reduction <add>, %120, %cst_31 [1] : vector<8x8xf32> to vector<8xf32>
    %122 = vector.shape_cast %121 : vector<8xf32> to vector<8x1xf32>
    %123 = tpu.reciprocal %122 {approx = true} : vector<8x1xf32> -> vector<8x1xf32>
    %124 = vector.broadcast %123 : vector<8x1xf32> to vector<8x8xf32>
    %125 = arith.mulf %120, %124 : vector<8x8xf32>
    %126 = vector.extract_strided_slice %114 {offsets = [0, 8], sizes = [8, 8], strides = [1, 1]} : vector<8x32xf32> to vector<8x8xf32>
    %cst_32 = arith.constant dense<0xFF800000> : vector<8xf32>
    %127 = vector.multi_reduction <maximumf>, %126, %cst_32 [1] : vector<8x8xf32> to vector<8xf32>
    %128 = vector.shape_cast %127 : vector<8xf32> to vector<8x1xf32>
    %129 = vector.broadcast %128 : vector<8x1xf32> to vector<8x8xf32>
    %130 = arith.subf %126, %129 : vector<8x8xf32>
    %131 = math.exp %130 : vector<8x8xf32>
    %cst_33 = arith.constant dense<0.000000e+00> : vector<8xf32>
    %132 = vector.multi_reduction <add>, %131, %cst_33 [1] : vector<8x8xf32> to vector<8xf32>
    %133 = vector.shape_cast %132 : vector<8xf32> to vector<8x1xf32>
    %134 = tpu.reciprocal %133 {approx = true} : vector<8x1xf32> -> vector<8x1xf32>
    %135 = vector.broadcast %134 : vector<8x1xf32> to vector<8x8xf32>
    %136 = arith.mulf %131, %135 : vector<8x8xf32>
    %137 = vector.extract_strided_slice %114 {offsets = [0, 16], sizes = [8, 8], strides = [1, 1]} : vector<8x32xf32> to vector<8x8xf32>
    %cst_34 = arith.constant dense<0xFF800000> : vector<8xf32>
    %138 = vector.multi_reduction <maximumf>, %137, %cst_34 [1] : vector<8x8xf32> to vector<8xf32>
    %139 = vector.shape_cast %138 : vector<8xf32> to vector<8x1xf32>
    %140 = vector.broadcast %139 : vector<8x1xf32> to vector<8x8xf32>
    %141 = arith.subf %137, %140 : vector<8x8xf32>
    %142 = math.exp %141 : vector<8x8xf32>
    %cst_35 = arith.constant dense<0.000000e+00> : vector<8xf32>
    %143 = vector.multi_reduction <add>, %142, %cst_35 [1] : vector<8x8xf32> to vector<8xf32>
    %144 = vector.shape_cast %143 : vector<8xf32> to vector<8x1xf32>
    %145 = tpu.reciprocal %144 {approx = true} : vector<8x1xf32> -> vector<8x1xf32>
    %146 = vector.broadcast %145 : vector<8x1xf32> to vector<8x8xf32>
    %147 = arith.mulf %142, %146 : vector<8x8xf32>
    %148 = vector.extract_strided_slice %114 {offsets = [0, 24], sizes = [8, 8], strides = [1, 1]} : vector<8x32xf32> to vector<8x8xf32>
    %cst_36 = arith.constant dense<0xFF800000> : vector<8xf32>
    %149 = vector.multi_reduction <maximumf>, %148, %cst_36 [1] : vector<8x8xf32> to vector<8xf32>
    %150 = vector.shape_cast %149 : vector<8xf32> to vector<8x1xf32>
    %151 = vector.broadcast %150 : vector<8x1xf32> to vector<8x8xf32>
    %152 = arith.subf %148, %151 : vector<8x8xf32>
    %153 = math.exp %152 : vector<8x8xf32>
    %cst_37 = arith.constant dense<0.000000e+00> : vector<8xf32>
    %154 = vector.multi_reduction <add>, %153, %cst_37 [1] : vector<8x8xf32> to vector<8xf32>
    %155 = vector.shape_cast %154 : vector<8xf32> to vector<8x1xf32>
    %156 = tpu.reciprocal %155 {approx = true} : vector<8x1xf32> -> vector<8x1xf32>
    %157 = vector.broadcast %156 : vector<8x1xf32> to vector<8x8xf32>
    %158 = arith.mulf %153, %157 : vector<8x8xf32>
    %159 = tpu.concatenate %125, %136, %147, %158 in 1 : vector<8x8xf32>, vector<8x8xf32>, vector<8x8xf32>, vector<8x8xf32> -> vector<8x32xf32>
    %160 = vector.extract_strided_slice %22 {offsets = [0, 64], sizes = [8, 16], strides = [1, 1]} : vector<24x128xf32> to vector<8x16xf32>
    %cst_38 = arith.constant 0.000000e+00 : f32
    %161 = vector.broadcast %cst_38 : f32 to vector<8x48xf32>
    %162 = tpu.concatenate %160, %161 in 1 : vector<8x16xf32>, vector<8x48xf32> -> vector<8x64xf32>
    %163 = vector.extract_strided_slice %22 {offsets = [0, 80], sizes = [8, 16], strides = [1, 1]} : vector<24x128xf32> to vector<8x16xf32>
    %cst_39 = arith.constant 0.000000e+00 : f32
    %164 = vector.broadcast %cst_39 : f32 to vector<8x16xf32>
    %cst_40 = arith.constant 0.000000e+00 : f32
    %165 = vector.broadcast %cst_40 : f32 to vector<8x32xf32>
    %166 = tpu.concatenate %164, %163, %165 in 1 : vector<8x16xf32>, vector<8x16xf32>, vector<8x32xf32> -> vector<8x64xf32>
    %167 = vector.extract_strided_slice %22 {offsets = [8, 64], sizes = [8, 16], strides = [1, 1]} : vector<24x128xf32> to vector<8x16xf32>
    %cst_41 = arith.constant 0.000000e+00 : f32
    %168 = vector.broadcast %cst_41 : f32 to vector<8x32xf32>
    %cst_42 = arith.constant 0.000000e+00 : f32
    %169 = vector.broadcast %cst_42 : f32 to vector<8x16xf32>
    %170 = tpu.concatenate %168, %167, %169 in 1 : vector<8x32xf32>, vector<8x16xf32>, vector<8x16xf32> -> vector<8x64xf32>
    %171 = vector.extract_strided_slice %22 {offsets = [8, 80], sizes = [8, 16], strides = [1, 1]} : vector<24x128xf32> to vector<8x16xf32>
    %cst_43 = arith.constant 0.000000e+00 : f32
    %172 = vector.broadcast %cst_43 : f32 to vector<8x48xf32>
    %173 = tpu.concatenate %172, %171 in 1 : vector<8x48xf32>, vector<8x16xf32> -> vector<8x64xf32>
    %174 = tpu.concatenate %162, %166, %170, %173 in 0 : vector<8x64xf32>, vector<8x64xf32>, vector<8x64xf32>, vector<8x64xf32> -> vector<32x64xf32>
    %175 = arith.truncf %159 : vector<8x32xf32> to vector<8x32xbf16>
    %176 = arith.truncf %174 : vector<32x64xf32> to vector<32x64xbf16>
    %cst_44 = arith.constant dense<0.000000e+00> : vector<8x64xf32>
    %177 = tpu.matmul %175, %176, %cst_44 {dimension_numbers = #tpu.dot_dimension_numbers<[1], [0], [0], [1], [0, 0, 1, 1], [], []>} : vector<8x32xbf16>, vector<32x64xbf16>, vector<8x64xf32> -> vector<8x64xf32>
    %178 = vector.extract_strided_slice %177 {offsets = [0, 0], sizes = [8, 32], strides = [1, 1]} : vector<8x64xf32> to vector<8x32xf32>
    %179 = vector.extract_strided_slice %177 {offsets = [0, 32], sizes = [8, 32], strides = [1, 1]} : vector<8x64xf32> to vector<8x32xf32>
    %180 = tpu.concatenate %178, %179 in 0 : vector<8x32xf32>, vector<8x32xf32> -> vector<16x32xf32>
    %181 = arith.truncf %180 : vector<16x32xf32> to vector<16x32xbf16>
    %c0_45 = arith.constant 0 : index
    %c0_46 = arith.constant 0 : index
    %c0_47 = arith.constant 0 : index
    %182 = vector.load %arg7[%c0_45, %c0_46, %c0_47] : memref<2x32x32xbf16, #tpu.memory_space<vmem>>, vector<1x32x32xbf16>
    %183 = vector.shape_cast %182 : vector<1x32x32xbf16> to vector<32x32xbf16>
    %cst_48 = arith.constant dense<0.000000e+00> : vector<16x32xf32>
    %184 = tpu.matmul %181, %183, %cst_48 {dimension_numbers = #tpu.dot_dimension_numbers<[1], [0], [0], [1], [0, 0, 1, 1], [], []>} : vector<16x32xbf16>, vector<32x32xbf16>, vector<16x32xf32> -> vector<16x32xf32>
    %185 = arith.addf %6, %184 : vector<16x32xf32>
    %c0_49 = arith.constant 0 : index
    %c0_50 = arith.constant 0 : index
    %c0_51 = arith.constant 0 : index
    %186 = vector.load %arg8[%c0_49, %c0_50, %c0_51] : memref<2x1x32xf32, #tpu.memory_space<vmem>>, vector<1x1x32xf32>
    %187 = vector.shape_cast %186 : vector<1x1x32xf32> to vector<1x32xf32>
    %c0_52 = arith.constant 0 : index
    %c0_53 = arith.constant 0 : index
    %c0_54 = arith.constant 0 : index
    %188 = vector.load %arg9[%c0_52, %c0_53, %c0_54] : memref<2x1x32xf32, #tpu.memory_space<vmem>>, vector<1x1x32xf32>
    %189 = vector.shape_cast %188 : vector<1x1x32xf32> to vector<1x32xf32>
    %cst_55 = arith.constant dense<0.000000e+00> : vector<16xf32>
    %190 = vector.multi_reduction <add>, %185, %cst_55 [1] : vector<16x32xf32> to vector<16xf32>
    %191 = vector.shape_cast %190 : vector<16xf32> to vector<16x1xf32>
    %cst_56 = arith.constant 3.200000e+01 : f32
    %192 = vector.broadcast %cst_56 : f32 to vector<16x1xf32>
    %193 = arith.divf %191, %192 : vector<16x1xf32>
    %194 = vector.broadcast %193 : vector<16x1xf32> to vector<16x32xf32>
    %195 = arith.subf %185, %194 : vector<16x32xf32>
    %196 = arith.mulf %195, %195 : vector<16x32xf32>
    %cst_57 = arith.constant dense<0.000000e+00> : vector<16xf32>
    %197 = vector.multi_reduction <add>, %196, %cst_57 [1] : vector<16x32xf32> to vector<16xf32>
    %198 = vector.shape_cast %197 : vector<16xf32> to vector<16x1xf32>
    %cst_58 = arith.constant 3.200000e+01 : f32
    %199 = vector.broadcast %cst_58 : f32 to vector<16x1xf32>
    %200 = arith.divf %198, %199 : vector<16x1xf32>
    %cst_59 = arith.constant 9.99999974E-6 : f32
    %201 = vector.broadcast %cst_59 : f32 to vector<16x1xf32>
    %202 = arith.addf %200, %201 : vector<16x1xf32>
    %203 = math.rsqrt %202 : vector<16x1xf32>
    %204 = vector.broadcast %203 : vector<16x1xf32> to vector<16x32xf32>
    %205 = arith.mulf %195, %204 : vector<16x32xf32>
    %206 = vector.broadcast %187 : vector<1x32xf32> to vector<16x32xf32>
    %207 = arith.mulf %205, %206 : vector<16x32xf32>
    %208 = vector.broadcast %189 : vector<1x32xf32> to vector<16x32xf32>
    %209 = arith.addf %207, %208 : vector<16x32xf32>
    %210 = arith.truncf %209 : vector<16x32xf32> to vector<16x32xbf16>
    %c0_60 = arith.constant 0 : index
    %c0_61 = arith.constant 0 : index
    %c0_62 = arith.constant 0 : index
    %211 = vector.load %arg10[%c0_60, %c0_61, %c0_62] : memref<2x32x64xbf16, #tpu.memory_space<vmem>>, vector<1x32x64xbf16>
    %212 = vector.shape_cast %211 : vector<1x32x64xbf16> to vector<32x64xbf16>
    %cst_63 = arith.constant dense<0.000000e+00> : vector<16x64xf32>
    %213 = tpu.matmul %210, %212, %cst_63 {dimension_numbers = #tpu.dot_dimension_numbers<[1], [0], [0], [1], [0, 0, 1, 1], [], []>} : vector<16x32xbf16>, vector<32x64xbf16>, vector<16x64xf32> -> vector<16x64xf32>
    %c0_64 = arith.constant 0 : index
    %c0_65 = arith.constant 0 : index
    %c0_66 = arith.constant 0 : index
    %214 = vector.load %arg11[%c0_64, %c0_65, %c0_66] : memref<2x1x64xf32, #tpu.memory_space<vmem>>, vector<1x1x64xf32>
    %215 = vector.shape_cast %214 : vector<1x1x64xf32> to vector<1x64xf32>
    %216 = vector.broadcast %215 : vector<1x64xf32> to vector<16x64xf32>
    %217 = arith.addf %213, %216 : vector<16x64xf32>
    %cst_67 = arith.constant 0.000000e+00 : f32
    %218 = vector.broadcast %cst_67 : f32 to vector<16x64xf32>
    %219 = arith.maximumf %217, %218 : vector<16x64xf32>
    %220 = arith.truncf %219 : vector<16x64xf32> to vector<16x64xbf16>
    %c0_68 = arith.constant 0 : index
    %c0_69 = arith.constant 0 : index
    %c0_70 = arith.constant 0 : index
    %221 = vector.load %arg12[%c0_68, %c0_69, %c0_70] : memref<2x64x32xbf16, #tpu.memory_space<vmem>>, vector<1x64x32xbf16>
    %222 = vector.shape_cast %221 : vector<1x64x32xbf16> to vector<64x32xbf16>
    %cst_71 = arith.constant dense<0.000000e+00> : vector<16x32xf32>
    %223 = tpu.matmul %220, %222, %cst_71 {dimension_numbers = #tpu.dot_dimension_numbers<[1], [0], [0], [1], [0, 0, 1, 1], [], []>} : vector<16x64xbf16>, vector<64x32xbf16>, vector<16x32xf32> -> vector<16x32xf32>
    %c0_72 = arith.constant 0 : index
    %c0_73 = arith.constant 0 : index
    %c0_74 = arith.constant 0 : index
    %224 = vector.load %arg13[%c0_72, %c0_73, %c0_74] : memref<2x1x32xf32, #tpu.memory_space<vmem>>, vector<1x1x32xf32>
    %225 = vector.shape_cast %224 : vector<1x1x32xf32> to vector<1x32xf32>
    %226 = vector.broadcast %225 : vector<1x32xf32> to vector<16x32xf32>
    %227 = arith.addf %223, %226 : vector<16x32xf32>
    %228 = arith.addf %209, %227 : vector<16x32xf32>
    %c0_75 = arith.constant 0 : index
    %c0_76 = arith.constant 0 : index
    %c0_77 = arith.constant 0 : index
    %229 = vector.load %arg14[%c0_75, %c0_76, %c0_77] : memref<2x1x32xf32, #tpu.memory_space<vmem>>, vector<1x1x32xf32>
    %230 = vector.shape_cast %229 : vector<1x1x32xf32> to vector<1x32xf32>
    %c0_78 = arith.constant 0 : index
    %c0_79 = arith.constant 0 : index
    %c0_80 = arith.constant 0 : index
    %231 = vector.load %arg15[%c0_78, %c0_79, %c0_80] : memref<2x1x32xf32, #tpu.memory_space<vmem>>, vector<1x1x32xf32>
    %232 = vector.shape_cast %231 : vector<1x1x32xf32> to vector<1x32xf32>
    %cst_81 = arith.constant dense<0.000000e+00> : vector<16xf32>
    %233 = vector.multi_reduction <add>, %228, %cst_81 [1] : vector<16x32xf32> to vector<16xf32>
    %234 = vector.shape_cast %233 : vector<16xf32> to vector<16x1xf32>
    %cst_82 = arith.constant 3.200000e+01 : f32
    %235 = vector.broadcast %cst_82 : f32 to vector<16x1xf32>
    %236 = arith.divf %234, %235 : vector<16x1xf32>
    %237 = vector.broadcast %236 : vector<16x1xf32> to vector<16x32xf32>
    %238 = arith.subf %228, %237 : vector<16x32xf32>
    %239 = arith.mulf %238, %238 : vector<16x32xf32>
    %cst_83 = arith.constant dense<0.000000e+00> : vector<16xf32>
    %240 = vector.multi_reduction <add>, %239, %cst_83 [1] : vector<16x32xf32> to vector<16xf32>
    %241 = vector.shape_cast %240 : vector<16xf32> to vector<16x1xf32>
    %cst_84 = arith.constant 3.200000e+01 : f32
    %242 = vector.broadcast %cst_84 : f32 to vector<16x1xf32>
    %243 = arith.divf %241, %242 : vector<16x1xf32>
    %cst_85 = arith.constant 9.99999974E-6 : f32
    %244 = vector.broadcast %cst_85 : f32 to vector<16x1xf32>
    %245 = arith.addf %243, %244 : vector<16x1xf32>
    %246 = math.rsqrt %245 : vector<16x1xf32>
    %247 = vector.broadcast %246 : vector<16x1xf32> to vector<16x32xf32>
    %248 = arith.mulf %238, %247 : vector<16x32xf32>
    %249 = vector.broadcast %230 : vector<1x32xf32> to vector<16x32xf32>
    %250 = arith.mulf %248, %249 : vector<16x32xf32>
    %251 = vector.broadcast %232 : vector<1x32xf32> to vector<16x32xf32>
    %252 = arith.addf %250, %251 : vector<16x32xf32>
    %253 = vector.extract_strided_slice %252 {offsets = [0, 0], sizes = [8, 32], strides = [1, 1]} : vector<16x32xf32> to vector<8x32xf32>
    %254 = vector.extract_strided_slice %252 {offsets = [8, 0], sizes = [8, 32], strides = [1, 1]} : vector<16x32xf32> to vector<8x32xf32>
    %255 = tpu.concatenate %253, %254 in 1 : vector<8x32xf32>, vector<8x32xf32> -> vector<8x64xf32>
    %c1 = arith.constant 1 : index
    %c0_86 = arith.constant 0 : index
    %c0_87 = arith.constant 0 : index
    %256 = vector.load %arg18[%c1, %c0_86, %c0_87] : memref<3x8x64xf32, #tpu.memory_space<vmem>>, vector<1x8x64xf32>
    %257 = vector.shape_cast %256 : vector<1x8x64xf32> to vector<8x64xf32>
    %258 = vector.shape_cast %255 : vector<8x64xf32> to vector<1x8x64xf32>
    tpu.vector_store %arg18[%c1, %c0_86, %c0_87], %258 {strides = array<i32>} : memref<3x8x64xf32, #tpu.memory_space<vmem>>, vector<1x8x64xf32>,
    %259 = vector.extract_strided_slice %252 {offsets = [0, 0], sizes = [8, 32], strides = [1, 1]} : vector<16x32xf32> to vector<8x32xf32>
    %260 = vector.extract_strided_slice %252 {offsets = [8, 0], sizes = [8, 32], strides = [1, 1]} : vector<16x32xf32> to vector<8x32xf32>
    %261 = tpu.concatenate %259, %260, %7 in 0 : vector<8x32xf32>, vector<8x32xf32>, vector<8x32xf32> -> vector<24x32xf32>
    %262 = arith.truncf %261 : vector<24x32xf32> to vector<24x32xbf16>
    %c1_88 = arith.constant 1 : index
    %c0_89 = arith.constant 0 : index
    %c0_90 = arith.constant 0 : index
    %263 = vector.load %arg6[%c1_88, %c0_89, %c0_90] : memref<2x32x128xbf16, #tpu.memory_space<vmem>>, vector<1x32x128xbf16>
    %264 = vector.shape_cast %263 : vector<1x32x128xbf16> to vector<32x128xbf16>
    %cst_91 = arith.constant dense<0.000000e+00> : vector<24x128xf32>
    %265 = tpu.matmul %262, %264, %cst_91 {dimension_numbers = #tpu.dot_dimension_numbers<[1], [0], [0], [1], [0, 0, 1, 1], [], []>} : vector<24x32xbf16>, vector<32x128xbf16>, vector<24x128xf32> -> vector<24x128xf32>
    %266 = vector.extract_strided_slice %265 {offsets = [0, 0], sizes = [8, 32], strides = [1, 1]} : vector<24x128xf32> to vector<8x32xf32>
    %267 = vector.broadcast %8 : vector<1x32xf32> to vector<8x32xf32>
    %268 = arith.addf %266, %267 : vector<8x32xf32>
    %269 = vector.broadcast %9 : vector<1x32xf32> to vector<8x32xf32>
    %270 = arith.addf %266, %269 : vector<8x32xf32>
    %271 = vector.extract_strided_slice %265 {offsets = [8, 0], sizes = [8, 32], strides = [1, 1]} : vector<24x128xf32> to vector<8x32xf32>
    %272 = vector.broadcast %8 : vector<1x32xf32> to vector<8x32xf32>
    %273 = arith.addf %271, %272 : vector<8x32xf32>
    %274 = vector.broadcast %9 : vector<1x32xf32> to vector<8x32xf32>
    %275 = arith.addf %271, %274 : vector<8x32xf32>
    %276 = tpu.concatenate %268, %273, %270, %275 in 1 : vector<8x32xf32>, vector<8x32xf32>, vector<8x32xf32>, vector<8x32xf32> -> vector<8x128xf32>
    %277 = vector.extract_strided_slice %265 {offsets = [0, 32], sizes = [8, 16], strides = [1, 1]} : vector<24x128xf32> to vector<8x16xf32>
    %cst_92 = arith.constant 0.000000e+00 : f32
    %278 = vector.broadcast %cst_92 : f32 to vector<8x112xf32>
    %279 = tpu.concatenate %277, %278 in 1 : vector<8x16xf32>, vector<8x112xf32> -> vector<8x128xf32>
    %280 = vector.extract_strided_slice %265 {offsets = [0, 48], sizes = [8, 16], strides = [1, 1]} : vector<24x128xf32> to vector<8x16xf32>
    %cst_93 = arith.constant 0.000000e+00 : f32
    %281 = vector.broadcast %cst_93 : f32 to vector<8x16xf32>
    %cst_94 = arith.constant 0.000000e+00 : f32
    %282 = vector.broadcast %cst_94 : f32 to vector<8x96xf32>
    %283 = tpu.concatenate %281, %280, %282 in 1 : vector<8x16xf32>, vector<8x16xf32>, vector<8x96xf32> -> vector<8x128xf32>
    %284 = vector.extract_strided_slice %265 {offsets = [8, 32], sizes = [8, 16], strides = [1, 1]} : vector<24x128xf32> to vector<8x16xf32>
    %cst_95 = arith.constant 0.000000e+00 : f32
    %285 = vector.broadcast %cst_95 : f32 to vector<8x32xf32>
    %cst_96 = arith.constant 0.000000e+00 : f32
    %286 = vector.broadcast %cst_96 : f32 to vector<8x80xf32>
    %287 = tpu.concatenate %285, %284, %286 in 1 : vector<8x32xf32>, vector<8x16xf32>, vector<8x80xf32> -> vector<8x128xf32>
    %288 = vector.extract_strided_slice %265 {offsets = [8, 48], sizes = [8, 16], strides = [1, 1]} : vector<24x128xf32> to vector<8x16xf32>
    %cst_97 = arith.constant 0.000000e+00 : f32
    %289 = vector.broadcast %cst_97 : f32 to vector<8x48xf32>
    %cst_98 = arith.constant 0.000000e+00 : f32
    %290 = vector.broadcast %cst_98 : f32 to vector<8x64xf32>
    %291 = tpu.concatenate %289, %288, %290 in 1 : vector<8x48xf32>, vector<8x16xf32>, vector<8x64xf32> -> vector<8x128xf32>
    %292 = vector.extract_strided_slice %265 {offsets = [16, 96], sizes = [8, 16], strides = [1, 1]} : vector<24x128xf32> to vector<8x16xf32>
    %cst_99 = arith.constant 0.000000e+00 : f32
    %293 = vector.broadcast %cst_99 : f32 to vector<8x64xf32>
    %cst_100 = arith.constant 0.000000e+00 : f32
    %294 = vector.broadcast %cst_100 : f32 to vector<8x48xf32>
    %295 = tpu.concatenate %293, %292, %294 in 1 : vector<8x64xf32>, vector<8x16xf32>, vector<8x48xf32> -> vector<8x128xf32>
    %296 = vector.extract_strided_slice %265 {offsets = [16, 112], sizes = [8, 16], strides = [1, 1]} : vector<24x128xf32> to vector<8x16xf32>
    %cst_101 = arith.constant 0.000000e+00 : f32
    %297 = vector.broadcast %cst_101 : f32 to vector<8x80xf32>
    %cst_102 = arith.constant 0.000000e+00 : f32
    %298 = vector.broadcast %cst_102 : f32 to vector<8x32xf32>
    %299 = tpu.concatenate %297, %296, %298 in 1 : vector<8x80xf32>, vector<8x16xf32>, vector<8x32xf32> -> vector<8x128xf32>
    %300 = vector.extract_strided_slice %265 {offsets = [16, 96], sizes = [8, 16], strides = [1, 1]} : vector<24x128xf32> to vector<8x16xf32>
    %cst_103 = arith.constant 0.000000e+00 : f32
    %301 = vector.broadcast %cst_103 : f32 to vector<8x96xf32>
    %cst_104 = arith.constant 0.000000e+00 : f32
    %302 = vector.broadcast %cst_104 : f32 to vector<8x16xf32>
    %303 = tpu.concatenate %301, %300, %302 in 1 : vector<8x96xf32>, vector<8x16xf32>, vector<8x16xf32> -> vector<8x128xf32>
    %304 = vector.extract_strided_slice %265 {offsets = [16, 112], sizes = [8, 16], strides = [1, 1]} : vector<24x128xf32> to vector<8x16xf32>
    %cst_105 = arith.constant 0.000000e+00 : f32
    %305 = vector.broadcast %cst_105 : f32 to vector<8x112xf32>
    %306 = tpu.concatenate %305, %304 in 1 : vector<8x112xf32>, vector<8x16xf32> -> vector<8x128xf32>
    %307 = tpu.concatenate %279, %283, %287, %291, %295, %299, %303, %306 in 0 : vector<8x128xf32>, vector<8x128xf32>, vector<8x128xf32>, vector<8x128xf32>, vector<8x128xf32>, vector<8x128xf32>, vector<8x128xf32>, vector<8x128xf32> -> vector<64x128xf32>
    %308 = arith.truncf %276 : vector<8x128xf32> to vector<8x128xbf16>
    %309 = arith.truncf %307 : vector<64x128xf32> to vector<64x128xbf16>
    %cst_106 = arith.constant dense<0.000000e+00> : vector<8x64xf32>
    %310 = tpu.matmul %308, %309, %cst_106 {dimension_numbers = #tpu.dot_dimension_numbers<[1], [1], [0], [0], [0, 0, 1, 0], [], []>} : vector<8x128xbf16>, vector<64x128xbf16>, vector<8x64xf32> -> vector<8x64xf32>
    %311 = vector.extract_strided_slice %310 {offsets = [0, 0], sizes = [8, 32], strides = [1, 1]} : vector<8x64xf32> to vector<8x32xf32>
    %312 = vector.extract_strided_slice %310 {offsets = [0, 32], sizes = [8, 32], strides = [1, 1]} : vector<8x64xf32> to vector<8x32xf32>
    %313 = vector.extract_strided_slice %312 {offsets = [0, 1], sizes = [8, 31], strides = [1, 1]} : vector<8x32xf32> to vector<8x31xf32>
    %314 = vector.extract_strided_slice %312 {offsets = [0, 0], sizes = [8, 1], strides = [1, 1]} : vector<8x32xf32> to vector<8x1xf32>
    %315 = tpu.concatenate %313, %314 in 1 : vector<8x31xf32>, vector<8x1xf32> -> vector<8x32xf32>
    %c6_i32_107 = arith.constant 6 : i32
    %316 = vector.broadcast %c6_i32_107 : i32 to vector<8x32xi32>
    %317 = arith.cmpi eq, %12, %316 : vector<8x32xi32>
    %318 = arith.select %317, %315, %312 : vector<8x32xi1>, vector<8x32xf32>
    %319 = vector.extract_strided_slice %312 {offsets = [0, 2], sizes = [8, 30], strides = [1, 1]} : vector<8x32xf32> to vector<8x30xf32>
    %320 = vector.extract_strided_slice %312 {offsets = [0, 0], sizes = [8, 2], strides = [1, 1]} : vector<8x32xf32> to vector<8x2xf32>
    %321 = tpu.concatenate %319, %320 in 1 : vector<8x30xf32>, vector<8x2xf32> -> vector<8x32xf32>
    %c5_i32_108 = arith.constant 5 : i32
    %322 = vector.broadcast %c5_i32_108 : i32 to vector<8x32xi32>
    %323 = arith.cmpi eq, %12, %322 : vector<8x32xi32>
    %324 = arith.select %323, %321, %318 : vector<8x32xi1>, vector<8x32xf32>
    %325 = vector.extract_strided_slice %312 {offsets = [0, 3], sizes = [8, 29], strides = [1, 1]} : vector<8x32xf32> to vector<8x29xf32>
    %326 = vector.extract_strided_slice %312 {offsets = [0, 0], sizes = [8, 3], strides = [1, 1]} : vector<8x32xf32> to vector<8x3xf32>
    %327 = tpu.concatenate %325, %326 in 1 : vector<8x29xf32>, vector<8x3xf32> -> vector<8x32xf32>
    %c4_i32_109 = arith.constant 4 : i32
    %328 = vector.broadcast %c4_i32_109 : i32 to vector<8x32xi32>
    %329 = arith.cmpi eq, %12, %328 : vector<8x32xi32>
    %330 = arith.select %329, %327, %324 : vector<8x32xi1>, vector<8x32xf32>
    %331 = vector.extract_strided_slice %312 {offsets = [0, 4], sizes = [8, 28], strides = [1, 1]} : vector<8x32xf32> to vector<8x28xf32>
    %332 = vector.extract_strided_slice %312 {offsets = [0, 0], sizes = [8, 4], strides = [1, 1]} : vector<8x32xf32> to vector<8x4xf32>
    %333 = tpu.concatenate %331, %332 in 1 : vector<8x28xf32>, vector<8x4xf32> -> vector<8x32xf32>
    %c3_i32_110 = arith.constant 3 : i32
    %334 = vector.broadcast %c3_i32_110 : i32 to vector<8x32xi32>
    %335 = arith.cmpi eq, %12, %334 : vector<8x32xi32>
    %336 = arith.select %335, %333, %330 : vector<8x32xi1>, vector<8x32xf32>
    %337 = vector.extract_strided_slice %312 {offsets = [0, 5], sizes = [8, 27], strides = [1, 1]} : vector<8x32xf32> to vector<8x27xf32>
    %338 = vector.extract_strided_slice %312 {offsets = [0, 0], sizes = [8, 5], strides = [1, 1]} : vector<8x32xf32> to vector<8x5xf32>
    %339 = tpu.concatenate %337, %338 in 1 : vector<8x27xf32>, vector<8x5xf32> -> vector<8x32xf32>
    %c2_i32_111 = arith.constant 2 : i32
    %340 = vector.broadcast %c2_i32_111 : i32 to vector<8x32xi32>
    %341 = arith.cmpi eq, %12, %340 : vector<8x32xi32>
    %342 = arith.select %341, %339, %336 : vector<8x32xi1>, vector<8x32xf32>
    %343 = vector.extract_strided_slice %312 {offsets = [0, 6], sizes = [8, 26], strides = [1, 1]} : vector<8x32xf32> to vector<8x26xf32>
    %344 = vector.extract_strided_slice %312 {offsets = [0, 0], sizes = [8, 6], strides = [1, 1]} : vector<8x32xf32> to vector<8x6xf32>
    %345 = tpu.concatenate %343, %344 in 1 : vector<8x26xf32>, vector<8x6xf32> -> vector<8x32xf32>
    %c1_i32_112 = arith.constant 1 : i32
    %346 = vector.broadcast %c1_i32_112 : i32 to vector<8x32xi32>
    %347 = arith.cmpi eq, %12, %346 : vector<8x32xi32>
    %348 = arith.select %347, %345, %342 : vector<8x32xi1>, vector<8x32xf32>
    %349 = vector.extract_strided_slice %312 {offsets = [0, 7], sizes = [8, 25], strides = [1, 1]} : vector<8x32xf32> to vector<8x25xf32>
    %350 = vector.extract_strided_slice %312 {offsets = [0, 0], sizes = [8, 7], strides = [1, 1]} : vector<8x32xf32> to vector<8x7xf32>
    %351 = tpu.concatenate %349, %350 in 1 : vector<8x25xf32>, vector<8x7xf32> -> vector<8x32xf32>
    %c0_i32_113 = arith.constant 0 : i32
    %352 = vector.broadcast %c0_i32_113 : i32 to vector<8x32xi32>
    %353 = arith.cmpi eq, %12, %352 : vector<8x32xi32>
    %354 = arith.select %353, %351, %348 : vector<8x32xi1>, vector<8x32xf32>
    %355 = arith.addf %311, %354 : vector<8x32xf32>
    %cst_114 = arith.constant -1.000000e+30 : f32
    %356 = vector.broadcast %cst_114 : f32 to vector<8x32xf32>
    %357 = arith.select %15, %356, %355 : vector<8x32xi1>, vector<8x32xf32>
    %358 = vector.extract_strided_slice %357 {offsets = [0, 0], sizes = [8, 8], strides = [1, 1]} : vector<8x32xf32> to vector<8x8xf32>
    %cst_115 = arith.constant dense<0xFF800000> : vector<8xf32>
    %359 = vector.multi_reduction <maximumf>, %358, %cst_115 [1] : vector<8x8xf32> to vector<8xf32>
    %360 = vector.shape_cast %359 : vector<8xf32> to vector<8x1xf32>
    %361 = vector.broadcast %360 : vector<8x1xf32> to vector<8x8xf32>
    %362 = arith.subf %358, %361 : vector<8x8xf32>
    %363 = math.exp %362 : vector<8x8xf32>
    %cst_116 = arith.constant dense<0.000000e+00> : vector<8xf32>
    %364 = vector.multi_reduction <add>, %363, %cst_116 [1] : vector<8x8xf32> to vector<8xf32>
    %365 = vector.shape_cast %364 : vector<8xf32> to vector<8x1xf32>
    %366 = tpu.reciprocal %365 {approx = true} : vector<8x1xf32> -> vector<8x1xf32>
    %367 = vector.broadcast %366 : vector<8x1xf32> to vector<8x8xf32>
    %368 = arith.mulf %363, %367 : vector<8x8xf32>
    %369 = vector.extract_strided_slice %357 {offsets = [0, 8], sizes = [8, 8], strides = [1, 1]} : vector<8x32xf32> to vector<8x8xf32>
    %cst_117 = arith.constant dense<0xFF800000> : vector<8xf32>
    %370 = vector.multi_reduction <maximumf>, %369, %cst_117 [1] : vector<8x8xf32> to vector<8xf32>
    %371 = vector.shape_cast %370 : vector<8xf32> to vector<8x1xf32>
    %372 = vector.broadcast %371 : vector<8x1xf32> to vector<8x8xf32>
    %373 = arith.subf %369, %372 : vector<8x8xf32>
    %374 = math.exp %373 : vector<8x8xf32>
    %cst_118 = arith.constant dense<0.000000e+00> : vector<8xf32>
    %375 = vector.multi_reduction <add>, %374, %cst_118 [1] : vector<8x8xf32> to vector<8xf32>
    %376 = vector.shape_cast %375 : vector<8xf32> to vector<8x1xf32>
    %377 = tpu.reciprocal %376 {approx = true} : vector<8x1xf32> -> vector<8x1xf32>
    %378 = vector.broadcast %377 : vector<8x1xf32> to vector<8x8xf32>
    %379 = arith.mulf %374, %378 : vector<8x8xf32>
    %380 = vector.extract_strided_slice %357 {offsets = [0, 16], sizes = [8, 8], strides = [1, 1]} : vector<8x32xf32> to vector<8x8xf32>
    %cst_119 = arith.constant dense<0xFF800000> : vector<8xf32>
    %381 = vector.multi_reduction <maximumf>, %380, %cst_119 [1] : vector<8x8xf32> to vector<8xf32>
    %382 = vector.shape_cast %381 : vector<8xf32> to vector<8x1xf32>
    %383 = vector.broadcast %382 : vector<8x1xf32> to vector<8x8xf32>
    %384 = arith.subf %380, %383 : vector<8x8xf32>
    %385 = math.exp %384 : vector<8x8xf32>
    %cst_120 = arith.constant dense<0.000000e+00> : vector<8xf32>
    %386 = vector.multi_reduction <add>, %385, %cst_120 [1] : vector<8x8xf32> to vector<8xf32>
    %387 = vector.shape_cast %386 : vector<8xf32> to vector<8x1xf32>
    %388 = tpu.reciprocal %387 {approx = true} : vector<8x1xf32> -> vector<8x1xf32>
    %389 = vector.broadcast %388 : vector<8x1xf32> to vector<8x8xf32>
    %390 = arith.mulf %385, %389 : vector<8x8xf32>
    %391 = vector.extract_strided_slice %357 {offsets = [0, 24], sizes = [8, 8], strides = [1, 1]} : vector<8x32xf32> to vector<8x8xf32>
    %cst_121 = arith.constant dense<0xFF800000> : vector<8xf32>
    %392 = vector.multi_reduction <maximumf>, %391, %cst_121 [1] : vector<8x8xf32> to vector<8xf32>
    %393 = vector.shape_cast %392 : vector<8xf32> to vector<8x1xf32>
    %394 = vector.broadcast %393 : vector<8x1xf32> to vector<8x8xf32>
    %395 = arith.subf %391, %394 : vector<8x8xf32>
    %396 = math.exp %395 : vector<8x8xf32>
    %cst_122 = arith.constant dense<0.000000e+00> : vector<8xf32>
    %397 = vector.multi_reduction <add>, %396, %cst_122 [1] : vector<8x8xf32> to vector<8xf32>
    %398 = vector.shape_cast %397 : vector<8xf32> to vector<8x1xf32>
    %399 = tpu.reciprocal %398 {approx = true} : vector<8x1xf32> -> vector<8x1xf32>
    %400 = vector.broadcast %399 : vector<8x1xf32> to vector<8x8xf32>
    %401 = arith.mulf %396, %400 : vector<8x8xf32>
    %402 = tpu.concatenate %368, %379, %390, %401 in 1 : vector<8x8xf32>, vector<8x8xf32>, vector<8x8xf32>, vector<8x8xf32> -> vector<8x32xf32>
    %403 = vector.extract_strided_slice %265 {offsets = [0, 64], sizes = [8, 16], strides = [1, 1]} : vector<24x128xf32> to vector<8x16xf32>
    %cst_123 = arith.constant 0.000000e+00 : f32
    %404 = vector.broadcast %cst_123 : f32 to vector<8x48xf32>
    %405 = tpu.concatenate %403, %404 in 1 : vector<8x16xf32>, vector<8x48xf32> -> vector<8x64xf32>
    %406 = vector.extract_strided_slice %265 {offsets = [0, 80], sizes = [8, 16], strides = [1, 1]} : vector<24x128xf32> to vector<8x16xf32>
    %cst_124 = arith.constant 0.000000e+00 : f32
    %407 = vector.broadcast %cst_124 : f32 to vector<8x16xf32>
    %cst_125 = arith.constant 0.000000e+00 : f32
    %408 = vector.broadcast %cst_125 : f32 to vector<8x32xf32>
    %409 = tpu.concatenate %407, %406, %408 in 1 : vector<8x16xf32>, vector<8x16xf32>, vector<8x32xf32> -> vector<8x64xf32>
    %410 = vector.extract_strided_slice %265 {offsets = [8, 64], sizes = [8, 16], strides = [1, 1]} : vector<24x128xf32> to vector<8x16xf32>
    %cst_126 = arith.constant 0.000000e+00 : f32
    %411 = vector.broadcast %cst_126 : f32 to vector<8x32xf32>
    %cst_127 = arith.constant 0.000000e+00 : f32
    %412 = vector.broadcast %cst_127 : f32 to vector<8x16xf32>
    %413 = tpu.concatenate %411, %410, %412 in 1 : vector<8x32xf32>, vector<8x16xf32>, vector<8x16xf32> -> vector<8x64xf32>
    %414 = vector.extract_strided_slice %265 {offsets = [8, 80], sizes = [8, 16], strides = [1, 1]} : vector<24x128xf32> to vector<8x16xf32>
    %cst_128 = arith.constant 0.000000e+00 : f32
    %415 = vector.broadcast %cst_128 : f32 to vector<8x48xf32>
    %416 = tpu.concatenate %415, %414 in 1 : vector<8x48xf32>, vector<8x16xf32> -> vector<8x64xf32>
    %417 = tpu.concatenate %405, %409, %413, %416 in 0 : vector<8x64xf32>, vector<8x64xf32>, vector<8x64xf32>, vector<8x64xf32> -> vector<32x64xf32>
    %418 = arith.truncf %402 : vector<8x32xf32> to vector<8x32xbf16>
    %419 = arith.truncf %417 : vector<32x64xf32> to vector<32x64xbf16>
    %cst_129 = arith.constant dense<0.000000e+00> : vector<8x64xf32>
    %420 = tpu.matmul %418, %419, %cst_129 {dimension_numbers = #tpu.dot_dimension_numbers<[1], [0], [0], [1], [0, 0, 1, 1], [], []>} : vector<8x32xbf16>, vector<32x64xbf16>, vector<8x64xf32> -> vector<8x64xf32>
    %421 = vector.extract_strided_slice %420 {offsets = [0, 0], sizes = [8, 32], strides = [1, 1]} : vector<8x64xf32> to vector<8x32xf32>
    %422 = vector.extract_strided_slice %420 {offsets = [0, 32], sizes = [8, 32], strides = [1, 1]} : vector<8x64xf32> to vector<8x32xf32>
    %423 = tpu.concatenate %421, %422 in 0 : vector<8x32xf32>, vector<8x32xf32> -> vector<16x32xf32>
    %424 = arith.truncf %423 : vector<16x32xf32> to vector<16x32xbf16>
    %c1_130 = arith.constant 1 : index
    %c0_131 = arith.constant 0 : index
    %c0_132 = arith.constant 0 : index
    %425 = vector.load %arg7[%c1_130, %c0_131, %c0_132] : memref<2x32x32xbf16, #tpu.memory_space<vmem>>, vector<1x32x32xbf16>
    %426 = vector.shape_cast %425 : vector<1x32x32xbf16> to vector<32x32xbf16>
    %cst_133 = arith.constant dense<0.000000e+00> : vector<16x32xf32>
    %427 = tpu.matmul %424, %426, %cst_133 {dimension_numbers = #tpu.dot_dimension_numbers<[1], [0], [0], [1], [0, 0, 1, 1], [], []>} : vector<16x32xbf16>, vector<32x32xbf16>, vector<16x32xf32> -> vector<16x32xf32>
    %428 = arith.addf %252, %427 : vector<16x32xf32>
    %c1_134 = arith.constant 1 : index
    %c0_135 = arith.constant 0 : index
    %c0_136 = arith.constant 0 : index
    %429 = vector.load %arg8[%c1_134, %c0_135, %c0_136] : memref<2x1x32xf32, #tpu.memory_space<vmem>>, vector<1x1x32xf32>
    %430 = vector.shape_cast %429 : vector<1x1x32xf32> to vector<1x32xf32>
    %c1_137 = arith.constant 1 : index
    %c0_138 = arith.constant 0 : index
    %c0_139 = arith.constant 0 : index
    %431 = vector.load %arg9[%c1_137, %c0_138, %c0_139] : memref<2x1x32xf32, #tpu.memory_space<vmem>>, vector<1x1x32xf32>
    %432 = vector.shape_cast %431 : vector<1x1x32xf32> to vector<1x32xf32>
    %cst_140 = arith.constant dense<0.000000e+00> : vector<16xf32>
    %433 = vector.multi_reduction <add>, %428, %cst_140 [1] : vector<16x32xf32> to vector<16xf32>
    %434 = vector.shape_cast %433 : vector<16xf32> to vector<16x1xf32>
    %cst_141 = arith.constant 3.200000e+01 : f32
    %435 = vector.broadcast %cst_141 : f32 to vector<16x1xf32>
    %436 = arith.divf %434, %435 : vector<16x1xf32>
    %437 = vector.broadcast %436 : vector<16x1xf32> to vector<16x32xf32>
    %438 = arith.subf %428, %437 : vector<16x32xf32>
    %439 = arith.mulf %438, %438 : vector<16x32xf32>
    %cst_142 = arith.constant dense<0.000000e+00> : vector<16xf32>
    %440 = vector.multi_reduction <add>, %439, %cst_142 [1] : vector<16x32xf32> to vector<16xf32>
    %441 = vector.shape_cast %440 : vector<16xf32> to vector<16x1xf32>
    %cst_143 = arith.constant 3.200000e+01 : f32
    %442 = vector.broadcast %cst_143 : f32 to vector<16x1xf32>
    %443 = arith.divf %441, %442 : vector<16x1xf32>
    %cst_144 = arith.constant 9.99999974E-6 : f32
    %444 = vector.broadcast %cst_144 : f32 to vector<16x1xf32>
    %445 = arith.addf %443, %444 : vector<16x1xf32>
    %446 = math.rsqrt %445 : vector<16x1xf32>
    %447 = vector.broadcast %446 : vector<16x1xf32> to vector<16x32xf32>
    %448 = arith.mulf %438, %447 : vector<16x32xf32>
    %449 = vector.broadcast %430 : vector<1x32xf32> to vector<16x32xf32>
    %450 = arith.mulf %448, %449 : vector<16x32xf32>
    %451 = vector.broadcast %432 : vector<1x32xf32> to vector<16x32xf32>
    %452 = arith.addf %450, %451 : vector<16x32xf32>
    %453 = arith.truncf %452 : vector<16x32xf32> to vector<16x32xbf16>
    %c1_145 = arith.constant 1 : index
    %c0_146 = arith.constant 0 : index
    %c0_147 = arith.constant 0 : index
    %454 = vector.load %arg10[%c1_145, %c0_146, %c0_147] : memref<2x32x64xbf16, #tpu.memory_space<vmem>>, vector<1x32x64xbf16>
    %455 = vector.shape_cast %454 : vector<1x32x64xbf16> to vector<32x64xbf16>
    %cst_148 = arith.constant dense<0.000000e+00> : vector<16x64xf32>
    %456 = tpu.matmul %453, %455, %cst_148 {dimension_numbers = #tpu.dot_dimension_numbers<[1], [0], [0], [1], [0, 0, 1, 1], [], []>} : vector<16x32xbf16>, vector<32x64xbf16>, vector<16x64xf32> -> vector<16x64xf32>
    %c1_149 = arith.constant 1 : index
    %c0_150 = arith.constant 0 : index
    %c0_151 = arith.constant 0 : index
    %457 = vector.load %arg11[%c1_149, %c0_150, %c0_151] : memref<2x1x64xf32, #tpu.memory_space<vmem>>, vector<1x1x64xf32>
    %458 = vector.shape_cast %457 : vector<1x1x64xf32> to vector<1x64xf32>
    %459 = vector.broadcast %458 : vector<1x64xf32> to vector<16x64xf32>
    %460 = arith.addf %456, %459 : vector<16x64xf32>
    %cst_152 = arith.constant 0.000000e+00 : f32
    %461 = vector.broadcast %cst_152 : f32 to vector<16x64xf32>
    %462 = arith.maximumf %460, %461 : vector<16x64xf32>
    %463 = arith.truncf %462 : vector<16x64xf32> to vector<16x64xbf16>
    %c1_153 = arith.constant 1 : index
    %c0_154 = arith.constant 0 : index
    %c0_155 = arith.constant 0 : index
    %464 = vector.load %arg12[%c1_153, %c0_154, %c0_155] : memref<2x64x32xbf16, #tpu.memory_space<vmem>>, vector<1x64x32xbf16>
    %465 = vector.shape_cast %464 : vector<1x64x32xbf16> to vector<64x32xbf16>
    %cst_156 = arith.constant dense<0.000000e+00> : vector<16x32xf32>
    %466 = tpu.matmul %463, %465, %cst_156 {dimension_numbers = #tpu.dot_dimension_numbers<[1], [0], [0], [1], [0, 0, 1, 1], [], []>} : vector<16x64xbf16>, vector<64x32xbf16>, vector<16x32xf32> -> vector<16x32xf32>
    %c1_157 = arith.constant 1 : index
    %c0_158 = arith.constant 0 : index
    %c0_159 = arith.constant 0 : index
    %467 = vector.load %arg13[%c1_157, %c0_158, %c0_159] : memref<2x1x32xf32, #tpu.memory_space<vmem>>, vector<1x1x32xf32>
    %468 = vector.shape_cast %467 : vector<1x1x32xf32> to vector<1x32xf32>
    %469 = vector.broadcast %468 : vector<1x32xf32> to vector<16x32xf32>
    %470 = arith.addf %466, %469 : vector<16x32xf32>
    %471 = arith.addf %452, %470 : vector<16x32xf32>
    %c1_160 = arith.constant 1 : index
    %c0_161 = arith.constant 0 : index
    %c0_162 = arith.constant 0 : index
    %472 = vector.load %arg14[%c1_160, %c0_161, %c0_162] : memref<2x1x32xf32, #tpu.memory_space<vmem>>, vector<1x1x32xf32>
    %473 = vector.shape_cast %472 : vector<1x1x32xf32> to vector<1x32xf32>
    %c1_163 = arith.constant 1 : index
    %c0_164 = arith.constant 0 : index
    %c0_165 = arith.constant 0 : index
    %474 = vector.load %arg15[%c1_163, %c0_164, %c0_165] : memref<2x1x32xf32, #tpu.memory_space<vmem>>, vector<1x1x32xf32>
    %475 = vector.shape_cast %474 : vector<1x1x32xf32> to vector<1x32xf32>
    %cst_166 = arith.constant dense<0.000000e+00> : vector<16xf32>
    %476 = vector.multi_reduction <add>, %471, %cst_166 [1] : vector<16x32xf32> to vector<16xf32>
    %477 = vector.shape_cast %476 : vector<16xf32> to vector<16x1xf32>
    %cst_167 = arith.constant 3.200000e+01 : f32
    %478 = vector.broadcast %cst_167 : f32 to vector<16x1xf32>
    %479 = arith.divf %477, %478 : vector<16x1xf32>
    %480 = vector.broadcast %479 : vector<16x1xf32> to vector<16x32xf32>
    %481 = arith.subf %471, %480 : vector<16x32xf32>
    %482 = arith.mulf %481, %481 : vector<16x32xf32>
    %cst_168 = arith.constant dense<0.000000e+00> : vector<16xf32>
    %483 = vector.multi_reduction <add>, %482, %cst_168 [1] : vector<16x32xf32> to vector<16xf32>
    %484 = vector.shape_cast %483 : vector<16xf32> to vector<16x1xf32>
    %cst_169 = arith.constant 3.200000e+01 : f32
    %485 = vector.broadcast %cst_169 : f32 to vector<16x1xf32>
    %486 = arith.divf %484, %485 : vector<16x1xf32>
    %cst_170 = arith.constant 9.99999974E-6 : f32
    %487 = vector.broadcast %cst_170 : f32 to vector<16x1xf32>
    %488 = arith.addf %486, %487 : vector<16x1xf32>
    %489 = math.rsqrt %488 : vector<16x1xf32>
    %490 = vector.broadcast %489 : vector<16x1xf32> to vector<16x32xf32>
    %491 = arith.mulf %481, %490 : vector<16x32xf32>
    %492 = vector.broadcast %473 : vector<1x32xf32> to vector<16x32xf32>
    %493 = arith.mulf %491, %492 : vector<16x32xf32>
    %494 = vector.broadcast %475 : vector<1x32xf32> to vector<16x32xf32>
    %495 = arith.addf %493, %494 : vector<16x32xf32>
    %496 = vector.extract_strided_slice %495 {offsets = [0, 0], sizes = [8, 32], strides = [1, 1]} : vector<16x32xf32> to vector<8x32xf32>
    %497 = vector.extract_strided_slice %495 {offsets = [8, 0], sizes = [8, 32], strides = [1, 1]} : vector<16x32xf32> to vector<8x32xf32>
    %498 = tpu.concatenate %496, %497 in 1 : vector<8x32xf32>, vector<8x32xf32> -> vector<8x64xf32>
    %c2 = arith.constant 2 : index
    %c0_171 = arith.constant 0 : index
    %c0_172 = arith.constant 0 : index
    %499 = vector.load %arg18[%c2, %c0_171, %c0_172] : memref<3x8x64xf32, #tpu.memory_space<vmem>>, vector<1x8x64xf32>
    %500 = vector.shape_cast %499 : vector<1x8x64xf32> to vector<8x64xf32>
    %501 = vector.shape_cast %498 : vector<8x64xf32> to vector<1x8x64xf32>
    tpu.vector_store %arg18[%c2, %c0_171, %c0_172], %501 {strides = array<i32>} : memref<3x8x64xf32, #tpu.memory_space<vmem>>, vector<1x8x64xf32>,
    %502 = arith.truncf %495 : vector<16x32xf32> to vector<16x32xbf16>
    %c0_173 = arith.constant 0 : index
    %c0_174 = arith.constant 0 : index
    %503 = vector.load %arg16[%c0_173, %c0_174] : memref<32x128xbf16, #tpu.memory_space<vmem>>, vector<32x128xbf16>
    %cst_175 = arith.constant dense<0.000000e+00> : vector<16x128xf32>
    %504 = tpu.matmul %502, %503, %cst_175 {dimension_numbers = #tpu.dot_dimension_numbers<[1], [0], [0], [1], [0, 0, 1, 1], [], []>} : vector<16x32xbf16>, vector<32x128xbf16>, vector<16x128xf32> -> vector<16x128xf32>
    %c0_176 = arith.constant 0 : index
    %c0_177 = arith.constant 0 : index
    %505 = vector.load %arg17[%c0_176, %c0_177] : memref<1x128xf32, #tpu.memory_space<vmem>>, vector<1x128xf32>
    %506 = vector.broadcast %505 : vector<1x128xf32> to vector<16x128xf32>
    %507 = arith.addf %504, %506 : vector<16x128xf32>
    %cst_178 = arith.constant dense<0xFF800000> : vector<16xf32>
    %508 = vector.multi_reduction <maximumf>, %507, %cst_178 [1] : vector<16x128xf32> to vector<16xf32>
    %509 = vector.shape_cast %508 : vector<16xf32> to vector<16x1xf32>
    %510 = vector.broadcast %509 : vector<16x1xf32> to vector<16x128xf32>
    %511 = arith.subf %507, %510 : vector<16x128xf32>
    %512 = math.exp %511 : vector<16x128xf32>
    %cst_179 = arith.constant dense<0.000000e+00> : vector<16xf32>
    %513 = vector.multi_reduction <add>, %512, %cst_179 [1] : vector<16x128xf32> to vector<16xf32>
    %514 = vector.shape_cast %513 : vector<16xf32> to vector<16x1xf32>
    %515 = math.log %514 : vector<16x1xf32>
    %516 = arith.addf %509, %515 : vector<16x1xf32>
    %517 = tpu.iota {dimensions = array<i32: 1>} : vector<16x128xi32>
    %c0_180 = arith.constant 0 : index
    %c0_181 = arith.constant 0 : index
    %518 = vector.load %arg3[%c0_180, %c0_181] : memref<8x2xi32, #tpu.memory_space<vmem>>, vector<8x2xi32>
    %519 = vector.extract_strided_slice %518 {offsets = [0, 0], sizes = [8, 1], strides = [1, 1]} : vector<8x2xi32> to vector<8x1xi32>
    %520 = vector.extract_strided_slice %518 {offsets = [0, 1], sizes = [8, 1], strides = [1, 1]} : vector<8x2xi32> to vector<8x1xi32>
    %521 = tpu.concatenate %519, %520 in 0 : vector<8x1xi32>, vector<8x1xi32> -> vector<16x1xi32>
    %522 = vector.broadcast %521 : vector<16x1xi32> to vector<16x128xi32>
    %523 = arith.cmpi eq, %517, %522 : vector<16x128xi32>
    %cst_182 = arith.constant 0.000000e+00 : f32
    %524 = vector.broadcast %cst_182 : f32 to vector<16x128xf32>
    %525 = arith.select %523, %507, %524 : vector<16x128xi1>, vector<16x128xf32>
    %cst_183 = arith.constant dense<0.000000e+00> : vector<16xf32>
    %526 = vector.multi_reduction <add>, %525, %cst_183 [1] : vector<16x128xf32> to vector<16xf32>
    %527 = vector.shape_cast %526 : vector<16xf32> to vector<16x1xf32>
    %528 = arith.subf %516, %527 : vector<16x1xf32>
    %529 = vector.extract_strided_slice %528 {offsets = [0, 0], sizes = [8, 1], strides = [1, 1]} : vector<16x1xf32> to vector<8x1xf32>
    %530 = vector.extract_strided_slice %528 {offsets = [8, 0], sizes = [8, 1], strides = [1, 1]} : vector<16x1xf32> to vector<8x1xf32>
    %531 = tpu.concatenate %529, %530 in 1 : vector<8x1xf32>, vector<8x1xf32> -> vector<8x2xf32>
    %cst_184 = arith.constant 0.000000e+00 : f32
    %532 = vector.broadcast %cst_184 : f32 to vector<8x126xf32>
    %533 = tpu.concatenate %531, %532 in 1 : vector<8x2xf32>, vector<8x126xf32> -> vector<8x128xf32>
    %c0_185 = arith.constant 0 : index
    %c0_186 = arith.constant 0 : index
    %534 = vector.load %arg19[%c0_185, %c0_186] : memref<8x128xf32, #tpu.memory_space<vmem>>, vector<8x128xf32>
    tpu.vector_store %arg19[%c0_185, %c0_186], %533 {strides = array<i32>} : memref<8x128xf32, #tpu.memory_space<vmem>>, vector<8x128xf32>,
    return
  }
  func.func @transform_0(%arg0: i32) -> (i32, i32) {
    %c0_i32 = arith.constant 0 : i32
    %c0_i32_0 = arith.constant 0 : i32
    %c0_i32_1 = arith.constant 0 : i32
    return %c0_i32, %c0_i32_0 : i32, i32
  }
  func.func @transform_1(%arg0: i32) -> (i32, i32) {
    %c0_i32 = arith.constant 0 : i32
    %c0_i32_0 = arith.constant 0 : i32
    %c0_i32_1 = arith.constant 0 : i32
    return %c0_i32, %c0_i32_0 : i32, i32
  }
  func.func @transform_2(%arg0: i32) -> (i32, i32) {
    %c0_i32 = arith.constant 0 : i32
    %c0_i32_0 = arith.constant 0 : i32
    %c0_i32_1 = arith.constant 0 : i32
    return %c0_i32, %c0_i32_0 : i32, i32
  }
  func.func @transform_3(%arg0: i32) -> (i32, i32) {
    %c0_i32 = arith.constant 0 : i32
    %c0_i32_0 = arith.constant 0 : i32
    %c0_i32_1 = arith.constant 0 : i32
    return %c0_i32, %c0_i32_0 : i32, i32
  }
  func.func @transform_4(%arg0: i32) -> (i32, i32) {
    %c0_i32 = arith.constant 0 : i32
    %c0_i32_0 = arith.constant 0 : i32
    %c0_i32_1 = arith.constant 0 : i32
    return %c0_i32, %c0_i32_0 : i32, i32
  }
  func.func @transform_5(%arg0: i32) -> (i32, i32, i32) {
    %c0_i32 = arith.constant 0 : i32
    %c0_i32_0 = arith.constant 0 : i32
    %c0_i32_1 = arith.constant 0 : i32
    %c0_i32_2 = arith.constant 0 : i32
    return %c0_i32, %c0_i32_0, %c0_i32_1 : i32, i32, i32
  }
  func.func @transform_6(%arg0: i32) -> (i32, i32, i32) {
    %c0_i32 = arith.constant 0 : i32
    %c0_i32_0 = arith.constant 0 : i32
    %c0_i32_1 = arith.constant 0 : i32
    %c0_i32_2 = arith.constant 0 : i32
    return %c0_i32, %c0_i32_0, %c0_i32_1 : i32, i32, i32
  }
  func.func @transform_7(%arg0: i32) -> (i32, i32, i32) {
    %c0_i32 = arith.constant 0 : i32
    %c0_i32_0 = arith.constant 0 : i32
    %c0_i32_1 = arith.constant 0 : i32
    %c0_i32_2 = arith.constant 0 : i32
    return %c0_i32, %c0_i32_0, %c0_i32_1 : i32, i32, i32
  }
  func.func @transform_8(%arg0: i32) -> (i32, i32, i32) {
    %c0_i32 = arith.constant 0 : i32
    %c0_i32_0 = arith.constant 0 : i32
    %c0_i32_1 = arith.constant 0 : i32
    %c0_i32_2 = arith.constant 0 : i32
    return %c0_i32, %c0_i32_0, %c0_i32_1 : i32, i32, i32
  }
  func.func @transform_9(%arg0: i32) -> (i32, i32, i32) {
    %c0_i32 = arith.constant 0 : i32
    %c0_i32_0 = arith.constant 0 : i32
    %c0_i32_1 = arith.constant 0 : i32
    %c0_i32_2 = arith.constant 0 : i32
    return %c0_i32, %c0_i32_0, %c0_i32_1 : i32, i32, i32
  }
  func.func @transform_10(%arg0: i32) -> (i32, i32, i32) {
    %c0_i32 = arith.constant 0 : i32
    %c0_i32_0 = arith.constant 0 : i32
    %c0_i32_1 = arith.constant 0 : i32
    %c0_i32_2 = arith.constant 0 : i32
    return %c0_i32, %c0_i32_0, %c0_i32_1 : i32, i32, i32
  }
  func.func @transform_11(%arg0: i32) -> (i32, i32, i32) {
    %c0_i32 = arith.constant 0 : i32
    %c0_i32_0 = arith.constant 0 : i32
    %c0_i32_1 = arith.constant 0 : i32
    %c0_i32_2 = arith.constant 0 : i32
    return %c0_i32, %c0_i32_0, %c0_i32_1 : i32, i32, i32
  }
  func.func @transform_12(%arg0: i32) -> (i32, i32, i32) {
    %c0_i32 = arith.constant 0 : i32
    %c0_i32_0 = arith.constant 0 : i32
    %c0_i32_1 = arith.constant 0 : i32
    %c0_i32_2 = arith.constant 0 : i32
    return %c0_i32, %c0_i32_0, %c0_i32_1 : i32, i32, i32
  }
  func.func @transform_13(%arg0: i32) -> (i32, i32, i32) {
    %c0_i32 = arith.constant 0 : i32
    %c0_i32_0 = arith.constant 0 : i32
    %c0_i32_1 = arith.constant 0 : i32
    %c0_i32_2 = arith.constant 0 : i32
    return %c0_i32, %c0_i32_0, %c0_i32_1 : i32, i32, i32
  }
  func.func @transform_14(%arg0: i32) -> (i32, i32, i32) {
    %c0_i32 = arith.constant 0 : i32
    %c0_i32_0 = arith.constant 0 : i32
    %c0_i32_1 = arith.constant 0 : i32
    %c0_i32_2 = arith.constant 0 : i32
    return %c0_i32, %c0_i32_0, %c0_i32_1 : i32, i32, i32
  }
  func.func @transform_15(%arg0: i32) -> (i32, i32) {
    %c0_i32 = arith.constant 0 : i32
    %c0_i32_0 = arith.constant 0 : i32
    %c0_i32_1 = arith.constant 0 : i32
    return %c0_i32, %c0_i32_0 : i32, i32
  }
  func.func @transform_16(%arg0: i32) -> (i32, i32) {
    %c0_i32 = arith.constant 0 : i32
    %c0_i32_0 = arith.constant 0 : i32
    %c0_i32_1 = arith.constant 0 : i32
    return %c0_i32, %c0_i32_0 : i32, i32
  }
  func.func @transform_17(%arg0: i32) -> (i32, i32, i32) {
    %c0_i32 = arith.constant 0 : i32
    %c0_i32_0 = arith.constant 0 : i32
    %c0_i32_1 = arith.constant 0 : i32
    %c0_i32_2 = arith.constant 0 : i32
    return %c0_i32, %c0_i32_0, %c0_i32_1 : i32, i32, i32
  }
  func.func @transform_18(%arg0: i32) -> (i32, i32) {
    %c0_i32 = arith.constant 0 : i32
    %c0_i32_0 = arith.constant 0 : i32
    %c0_i32_1 = arith.constant 0 : i32
    return %c0_i32, %c0_i32_0 : i32, i32
  }
}

</mosaic_0001>

<llo_original>
// kernel: mem_transformer_forward.1
$region0: #{mem_transformer_forward.1}
  #allocation0 [shape = 'u32[]', space=smem, size = 0x4, offset = 0x4, fixed_abs, tag = 'smem constant byte address 0x4 - core index']
  #allocation1 [shape = 'u32[144,128]{1,0:T(1,128)}', space=vmem, size = 0x12000, scoped, tag = 'internal scratch']
  %s0 = inlined_call_operand.vmem [shape: f32[8,64], index: 0, kind: input, shape index: {}]
  %s1 = inlined_call_operand.vmem [shape: f32[8,32], index: 1, kind: input, shape index: {}]
  %s2 = inlined_call_operand.vmem [shape: s32[8,2], index: 2, kind: input, shape index: {}]
  %s3 = inlined_call_operand.vmem [shape: f32[1,32], index: 3, kind: input, shape index: {}]
  %s4 = inlined_call_operand.vmem [shape: f32[1,32], index: 4, kind: input, shape index: {}]
  %s5 = inlined_call_operand.vmem [shape: bf16[2,32,128], index: 5, kind: input, shape index: {}]
  %s6 = inlined_call_operand.vmem [shape: bf16[2,32,32], index: 6, kind: input, shape index: {}]
  %s7 = inlined_call_operand.vmem [shape: f32[2,1,32], index: 7, kind: input, shape index: {}]
  %s8 = inlined_call_operand.vmem [shape: f32[2,1,32], index: 8, kind: input, shape index: {}]
  %s9 = inlined_call_operand.vmem [shape: bf16[2,32,64], index: 9, kind: input, shape index: {}]
  %s10 = inlined_call_operand.vmem [shape: f32[2,1,64], index: 10, kind: input, shape index: {}]
  %s11 = inlined_call_operand.vmem [shape: bf16[2,64,32], index: 11, kind: input, shape index: {}]
  %s12 = inlined_call_operand.vmem [shape: f32[2,1,32], index: 12, kind: input, shape index: {}]
  %s13 = inlined_call_operand.vmem [shape: f32[2,1,32], index: 13, kind: input, shape index: {}]
  %s14 = inlined_call_operand.vmem [shape: f32[2,1,32], index: 14, kind: input, shape index: {}]
  %s15 = inlined_call_operand.vmem [shape: bf16[32,128], index: 15, kind: input, shape index: {}]
  %s16 = inlined_call_operand.vmem [shape: f32[1,128], index: 16, kind: input, shape index: {}]
  %s17 = inlined_call_operand.vmem [shape: f32[3,8,64], index: 17, kind: output, shape index: {0}]
  %s18 = inlined_call_operand.vmem [shape: f32[8,128], index: 18, kind: output, shape index: {1}]
  %19 = xla_tuple %s17, %s18
  %s20 = sld [smem:[#allocation0]]
  $region86: #{mem_transformer_forward.1} parent=0
    _
  %s22 = ssub.s32 1, %s20
  %s23 = scalar_select 0, %s22, %s20
  // Predicated region
  $region2: #{mem_transformer_forward.1} parent=0 // pred_check
    _
  $region3: #{mem_transformer_forward.1} parent=0 // pred_check_branch
    %25 = sbr.rel (0) target = $region5
  $region4: #{mem_transformer_forward.1} parent=0 // pred_region
    _
  $region5: #{mem_transformer_forward.1} parent=0 // pred_fallthru
    _
  // Predicated region
  $region6: #{mem_transformer_forward.1} parent=0 // pred_check
    _
  $region7: #{mem_transformer_forward.1} parent=0 // pred_check_branch
    %27 = sbr.rel (0) target = $region9
  $region8: #{mem_transformer_forward.1} parent=0 // pred_region
    _
  $region9: #{mem_transformer_forward.1} parent=0 // pred_fallthru
    _
  // Predicated region
  $region10: #{mem_transformer_forward.1} parent=0 // pred_check
    _
  $region11: #{mem_transformer_forward.1} parent=0 // pred_check_branch
    %29 = sbr.rel (0) target = $region13
  $region12: #{mem_transformer_forward.1} parent=0 // pred_region
    _
  $region13: #{mem_transformer_forward.1} parent=0 // pred_fallthru
    _
  // Predicated region
  $region14: #{mem_transformer_forward.1} parent=0 // pred_check
    _
  $region15: #{mem_transformer_forward.1} parent=0 // pred_check_branch
    %31 = sbr.rel (0) target = $region17
  $region16: #{mem_transformer_forward.1} parent=0 // pred_region
    _
  $region17: #{mem_transformer_forward.1} parent=0 // pred_fallthru
    _
  // Predicated region
  $region18: #{mem_transformer_forward.1} parent=0 // pred_check
    _
  $region19: #{mem_transformer_forward.1} parent=0 // pred_check_branch
    %33 = sbr.rel (0) target = $region21
  $region20: #{mem_transformer_forward.1} parent=0 // pred_region
    _
  $region21: #{mem_transformer_forward.1} parent=0 // pred_fallthru
    _
  // Predicated region
  $region22: #{mem_transformer_forward.1} parent=0 // pred_check
    _
  $region23: #{mem_transformer_forward.1} parent=0 // pred_check_branch
    %35 = sbr.rel (0) target = $region25
  $region24: #{mem_transformer_forward.1} parent=0 // pred_region
    _
  $region25: #{mem_transformer_forward.1} parent=0 // pred_fallthru
    _
  // Predicated region
  $region26: #{mem_transformer_forward.1} parent=0 // pred_check
    _
  $region27: #{mem_transformer_forward.1} parent=0 // pred_check_branch
    %37 = sbr.rel (0) target = $region29
  $region28: #{mem_transformer_forward.1} parent=0 // pred_region
    _
  $region29: #{mem_transformer_forward.1} parent=0 // pred_fallthru
    _
  // Predicated region
  $region30: #{mem_transformer_forward.1} parent=0 // pred_check
    _
  $region31: #{mem_transformer_forward.1} parent=0 // pred_check_branch
    %39 = sbr.rel (0) target = $region33
  $region32: #{mem_transformer_forward.1} parent=0 // pred_region
    _
  $region33: #{mem_transformer_forward.1} parent=0 // pred_fallthru
    _
  // Predicated region
  $region34: #{mem_transformer_forward.1} parent=0 // pred_check
    _
  $region35: #{mem_transformer_forward.1} parent=0 // pred_check_branch
    %41 = sbr.rel (0) target = $region37
  $region36: #{mem_transformer_forward.1} parent=0 // pred_region
    _
  $region37: #{mem_transformer_forward.1} parent=0 // pred_fallthru
    _
  // Predicated region
  $region38: #{mem_transformer_forward.1} parent=0 // pred_check
    _
  $region39: #{mem_transformer_forward.1} parent=0 // pred_check_branch
    %43 = sbr.rel (0) target = $region41
  $region40: #{mem_transformer_forward.1} parent=0 // pred_region
    _
  $region41: #{mem_transformer_forward.1} parent=0 // pred_fallthru
    _
  // Predicated region
  $region42: #{mem_transformer_forward.1} parent=0 // pred_check
    _
  $region43: #{mem_transformer_forward.1} parent=0 // pred_check_branch
    %45 = sbr.rel (0) target = $region45
  $region44: #{mem_transformer_forward.1} parent=0 // pred_region
    _
  $region45: #{mem_transformer_forward.1} parent=0 // pred_fallthru
    _
  // Predicated region
  $region46: #{mem_transformer_forward.1} parent=0 // pred_check
    _
  $region47: #{mem_transformer_forward.1} parent=0 // pred_check_branch
    %47 = sbr.rel (0) target = $region49
  $region48: #{mem_transformer_forward.1} parent=0 // pred_region
    _
  $region49: #{mem_transformer_forward.1} parent=0 // pred_fallthru
    _
  // Predicated region
  $region50: #{mem_transformer_forward.1} parent=0 // pred_check
    _
  $region51: #{mem_transformer_forward.1} parent=0 // pred_check_branch
    %49 = sbr.rel (0) target = $region53
  $region52: #{mem_transformer_forward.1} parent=0 // pred_region
    _
  $region53: #{mem_transformer_forward.1} parent=0 // pred_fallthru
    _
  // Predicated region
  $region54: #{mem_transformer_forward.1} parent=0 // pred_check
    _
  $region55: #{mem_transformer_forward.1} parent=0 // pred_check_branch
    %51 = sbr.rel (0) target = $region57
  $region56: #{mem_transformer_forward.1} parent=0 // pred_region
    _
  $region57: #{mem_transformer_forward.1} parent=0 // pred_fallthru
    _
  // Predicated region
  $region58: #{mem_transformer_forward.1} parent=0 // pred_check
    _
  $region59: #{mem_transformer_forward.1} parent=0 // pred_check_branch
    %53 = sbr.rel (0) target = $region61
  $region60: #{mem_transformer_forward.1} parent=0 // pred_region
    _
  $region61: #{mem_transformer_forward.1} parent=0 // pred_fallthru
    _
  // Predicated region
  $region62: #{mem_transformer_forward.1} parent=0 // pred_check
    _
  $region63: #{mem_transformer_forward.1} parent=0 // pred_check_branch
    %55 = sbr.rel (0) target = $region65
  $region64: #{mem_transformer_forward.1} parent=0 // pred_region
    _
  $region65: #{mem_transformer_forward.1} parent=0 // pred_fallthru
    _
  // Predicated region
  $region66: #{mem_transformer_forward.1} parent=0 // pred_check
    _
  $region67: #{mem_transformer_forward.1} parent=0 // pred_check_branch
    %57 = sbr.rel (0) target = $region69
  $region68: #{mem_transformer_forward.1} parent=0 // pred_region
    _
  $region69: #{mem_transformer_forward.1} parent=0 // pred_fallthru
    _
  %v59 = vld [vmem:[%s0] sm:$0xff]
  %vm60 = vcmask 523264
  %61 = vst.msk [vmem:[%s17] sm:$0xff] %vm60, %v59
  %63 = vrot.lane.b32.xlu0 %v59, 96
  %v64 = vpop.permute.xlu0 %63
  %v66 = vld [vmem:[%s1] sm:$0xff]
  %v67 = vld [vmem:[%s3] sm:$0x1]
  %v68 = vld [vmem:[%s4] sm:$0x1]
  %v69 = vlaneseq
  %v70 = vand.u32 %v69, 127
  %71 = vrot.lane.b32.xlu0 %v70, 8
  %v72 = vpop.permute.xlu0 %71
  %73 = vrot.lane.b32.xlu0 %v70, 16
  %v74 = vpop.permute.xlu0 %73
  %75 = vrot.lane.b32.xlu0 %v70, 24
  %v76 = vpop.permute.xlu0 %75
  %vm77 = vcmask 64512
  %v78 = vsel %vm77, %v70, %v72
  %vm79 = vcmask 130048
  %v80 = vsel %vm79, %v78, %v74
  %vm81 = vcmask 195584
  %v82 = vsel %vm81, %v80, %v76
  %v83 = vlaneseq
  %v84 = vshrl.u32 %v83, 7
  %vm85 = vcmp.gt.s32.totalorder %v82, %v84
  %v86 = vpack.c.bf16 %v64, %v59
  %v87 = vpack.c.bf16 %v66, %v66
  %v88 = vld [vmem:[%s5] sm:$0xf]
  %v89 = vld [vmem:[%s5 + $0x4] sm:$0xf]
  %v90 = vld [vmem:[%s5 + $0x8] sm:$0xf]
  %v91 = vld [vmem:[%s5 + $0xc] sm:$0xf]
  %v96 = vunpack.c.l.b16 %v88
  %v97 = vunpack.c.l.b16 %v89
  %v98 = vunpack.c.l.b16 %v90
  %v99 = vunpack.c.l.b16 %v91
  %v100 = vpack.c.b16 %v97, %v96
  %v101 = vpack.c.b16 %v99, %v98
  %vm104 = vcmask 261120
  %v106 = vsel %vm104, %v86, 0
  %v109 = vsel %vm104, %v87, 0
  %111 = vmatprep.subr.bf16.mxu0 0
  %112 = vmatpush1.bf16.msra.mxu0 %v100
  %113 = vmatprep.subr.bf16.mxu0 0
  %114 = vmatpush1.bf16.msra.mxu0 %v101
  %115 = vmatprep.subr.bf16.mxu0 0
  %116 = vmatpush1.bf16.msra.mxu0 0
  %117 = vmatprep.subr.bf16.mxu0 0
  %118 = vmatpush1.bf16.msra.mxu0 0
  %119 = vmatprep.subr.bf16.mxu0 0
  %120 = vmatpush1.bf16.msra.mxu0 0
  %121 = vmatprep.subr.bf16.mxu0 0
  %122 = vmatpush1.bf16.msra.mxu0 0
  %123 = vmatprep.subr.bf16.mxu0 0
  %124 = vmatpush1.bf16.msra.mxu0 0
  %125 = vmatprep.subr.bf16.mxu0 0
  %126 = vmatpush1.bf16.msra.mxu0 0
  %127 = vmatprep.subr.bf16.mxu0 0
  %128 = vmatpush1.bf16.msra.mxu0 0
  %129 = vmatprep.subr.bf16.mxu0 0
  %130 = vmatpush1.bf16.msra.mxu0 0
  %131 = vmatprep.subr.bf16.mxu0 0
  %132 = vmatpush1.bf16.msra.mxu0 0
  %133 = vmatprep.subr.bf16.mxu0 0
  %134 = vmatpush1.bf16.msra.mxu0 0
  %135 = vmatprep.subr.bf16.mxu0 0
  %136 = vmatpush1.bf16.msra.mxu0 0
  %137 = vmatprep.subr.bf16.mxu0 0
  %138 = vmatpush1.bf16.msra.mxu0 0
  %139 = vmatprep.subr.bf16.mxu0 0
  %140 = vmatpush1.bf16.msra.mxu0 0
  %141 = vmatprep.subr.bf16.mxu0 0
  %142 = vmatpush1.bf16.msra.mxu0 0
  %143 = vmatprep.mubr.bf16.mxu0 0
  %144 = vmatmul.mubr.bf16.gmra.mrb[0].mxu0 %v106
  %v145 = vpop.f32.mrb[0].mxu0
  %v146 = vadd.f32 0.0, %v145
  %v147 = vpop.f32.mrb[0].mxu0
  %v148 = vpop.f32.mrb[0].mxu0
  %v149 = vadd.f32 0.0, %v148
  %v150 = vpop.f32.mrb[0].mxu0
  %151 = vmatprep.mubr.bf16.mxu0 0
  %152 = vmatmul.mubr.bf16.gmra.mrb[0].mxu0 %v109
  %v153 = vpop.f32.mrb[0].mxu0
  %v154 = vadd.f32 0.0, %v153
  %v155 = vpop.f32.mrb[0].mxu0
  %v156 = vpop.f32.mrb[0].mxu0
  %v157 = vpop.f32.mrb[0].mxu0
  %158 = vdwg.mxu0
  %v160 = vlaneseq
  %v161 = vshrl.u32 %v160, 7
  %v162 = vsub.s32 0, %v161
  %v163 = vrot.slane %v67, %v162
  %v165 = vadd.f32 %v146, %v163
  %v167 = vlaneseq
  %v168 = vshrl.u32 %v167, 7
  %v169 = vsub.s32 0, %v168
  %v170 = vrot.slane %v68, %v169
  %v172 = vadd.f32 %v146, %v170
  %v173 = vadd.f32 %v149, %v163
  %v174 = vadd.f32 %v149, %v170
  %176 = vrot.lane.b32.xlu0 %v173, 32
  %v177 = vpop.permute.xlu0 %176
  %180 = vrot.lane.b32.xlu0 %v172, 64
  %v181 = vpop.permute.xlu0 %180
  %184 = vrot.lane.b32.xlu0 %v174, 96
  %v185 = vpop.permute.xlu0 %184
  %v187 = vsel %vm104, %v165, %v177
  %v188 = vsel %vm60, %v187, %v181
  %vm189 = vcmask 785408
  %v190 = vsel %vm189, %v188, %v185
  %192 = vrot.lane.b32.xlu0 %v146, 96
  %v193 = vpop.permute.xlu0 %192
  %v195 = vsel %vm79, %v193, 0.0
  %v196 = vsel %vm79, 0.0, %v193
  %v197 = vsel %vm104, %v196, 0.0
  %v198 = vsel %vm104, 0.0, %v149
  %vm199 = vcmask 392192
  %v200 = vsel %vm199, %v198, 0.0
  %v201 = vsel %vm199, 0.0, %v149
  %v202 = vsel %vm60, %v201, 0.0
  %204 = vrot.lane.b32.xlu0 %v154, 96
  %v205 = vpop.permute.xlu0 %204
  %v207 = vsel %vm60, 0.0, %v205
  %vm208 = vcmask 654336
  %v209 = vsel %vm208, %v207, 0.0
  %v210 = vsel %vm208, 0.0, %v205
  %v211 = vsel %vm189, %v210, 0.0
  %v212 = vsel %vm189, 0.0, %v154
  %vm213 = vcmask 916480
  %v214 = vsel %vm213, %v212, 0.0
  %v215 = vsel %vm213, 0.0, %v154
  %v216 = vpack.c.bf16 %v190, %v190
  %v217 = vpack.c.bf16 %v197, %v195
  %v218 = vpack.c.bf16 %v202, %v200
  %v219 = vpack.c.bf16 %v211, %v209
  %v220 = vpack.c.bf16 %v215, %v214
  %221 = vmatprep.subr.bf16.mxu0 0
  %222 = vmatpush1.bf16.xpose.msra.mxu0 %v217
  %223 = vmatprep.subr.bf16.mxu0 0
  %224 = vmatpush1.bf16.xpose.msra.mxu0 %v218
  %225 = vmatprep.subr.bf16.mxu0 0
  %226 = vmatpush1.bf16.xpose.msra.mxu0 %v219
  %227 = vmatprep.subr.bf16.mxu0 0
  %228 = vmatpush1.bf16.xpose.msra.mxu0 %v220
  %229 = vmatprep.subr.bf16.mxu0 0
  %230 = vmatpush1.bf16.xpose.msra.mxu0 0
  %231 = vmatprep.subr.bf16.mxu0 0
  %232 = vmatpush1.bf16.xpose.msra.mxu0 0
  %233 = vmatprep.subr.bf16.mxu0 0
  %234 = vmatpush1.bf16.xpose.msra.mxu0 0
  %235 = vmatprep.subr.bf16.mxu0 0
  %236 = vmatpush1.bf16.xpose.msra.mxu0 0
  %237 = vmatprep.subr.bf16.mxu0 0
  %238 = vmatpush1.bf16.xpose.msra.mxu0 0
  %239 = vmatprep.subr.bf16.mxu0 0
  %240 = vmatpush1.bf16.xpose.msra.mxu0 0
  %241 = vmatprep.subr.bf16.mxu0 0
  %242 = vmatpush1.bf16.xpose.msra.mxu0 0
  %243 = vmatprep.subr.bf16.mxu0 0
  %244 = vmatpush1.bf16.xpose.msra.mxu0 0
  %245 = vmatprep.subr.bf16.mxu0 0
  %246 = vmatpush1.bf16.xpose.msra.mxu0 0
  %247 = vmatprep.subr.bf16.mxu0 0
  %248 = vmatpush1.bf16.xpose.msra.mxu0 0
  %249 = vmatprep.subr.bf16.mxu0 0
  %250 = vmatpush1.bf16.xpose.msra.mxu0 0
  %251 = vmatprep.subr.bf16.mxu0 0
  %252 = vmatpush1.bf16.xpose.msra.mxu0 0
  %253 = vmatprep.mubr.bf16.mxu0 0
  %254 = vmatmul.mubr.bf16.gmra.mrb[0].mxu0 %v216
  %v255 = vpop.f32.mrb[0].mxu0
  %v256 = vadd.f32 0.0, %v255
  %v257 = vpop.f32.mrb[0].mxu0
  %v258 = vpop.f32.mrb[0].mxu0
  %v259 = vpop.f32.mrb[0].mxu0
  %260 = vdwg.mxu0
  %262 = vrot.lane.b32.xlu0 %v256, 95
  %v263 = vpop.permute.xlu0 %262
  %265 = vrot.lane.b32.xlu0 %v256, 127
  %v266 = vpop.permute.xlu0 %265
  %vm268 = vcmask 252928
  %v269 = vsel %vm268, %v263, %v266
  %vm270 = vcmp.eq.s32.totalorder %v84, 6
  %271 = vrot.lane.b32.xlu0 %v256, 96
  %v272 = vpop.permute.xlu0 %271
  %v274 = vsel %vm270, %v269, %v272
  %275 = vrot.lane.b32.xlu0 %v256, 94
  %v276 = vpop.permute.xlu0 %275
  %278 = vrot.lane.b32.xlu0 %v256, 126
  %v279 = vpop.permute.xlu0 %278
  %vm281 = vcmask 244736
  %v282 = vsel %vm281, %v276, %v279
  %vm283 = vcmp.eq.s32.totalorder %v84, 5
  %v284 = vsel %vm283, %v282, %v274
  %285 = vrot.lane.b32.xlu0 %v256, 93
  %v286 = vpop.permute.xlu0 %285
  %288 = vrot.lane.b32.xlu0 %v256, 125
  %v289 = vpop.permute.xlu0 %288
  %vm291 = vcmask 236544
  %v292 = vsel %vm291, %v286, %v289
  %vm293 = vcmp.eq.s32.totalorder %v84, 4
  %v294 = vsel %vm293, %v292, %v284
  %295 = vrot.lane.b32.xlu0 %v256, 92
  %v296 = vpop.permute.xlu0 %295
  %298 = vrot.lane.b32.xlu0 %v256, 124
  %v299 = vpop.permute.xlu0 %298
  %vm301 = vcmask 228352
  %v302 = vsel %vm301, %v296, %v299
  %vm303 = vcmp.eq.s32.totalorder %v84, 3
  %v304 = vsel %vm303, %v302, %v294
  %305 = vrot.lane.b32.xlu0 %v256, 91
  %v306 = vpop.permute.xlu0 %305
  %308 = vrot.lane.b32.xlu0 %v256, 123
  %v309 = vpop.permute.xlu0 %308
  %vm311 = vcmask 220160
  %v312 = vsel %vm311, %v306, %v309
  %vm313 = vcmp.eq.s32.totalorder %v84, 2
  %v314 = vsel %vm313, %v312, %v304
  %315 = vrot.lane.b32.xlu0 %v256, 90
  %v316 = vpop.permute.xlu0 %315
  %318 = vrot.lane.b32.xlu0 %v256, 122
  %v319 = vpop.permute.xlu0 %318
  %vm321 = vcmask 211968
  %v322 = vsel %vm321, %v316, %v319
  %vm323 = vcmp.eq.s32.totalorder %v84, 1
  %v324 = vsel %vm323, %v322, %v314
  %325 = vrot.lane.b32.xlu0 %v256, 89
  %v326 = vpop.permute.xlu0 %325
  %328 = vrot.lane.b32.xlu0 %v256, 121
  %v329 = vpop.permute.xlu0 %328
  %vm331 = vcmask 203776
  %v332 = vsel %vm331, %v326, %v329
  %vm333 = vcmp.eq.s32.totalorder %v84, 0
  %v334 = vsel %vm333, %v332, %v324
  %v335 = vadd.f32 %v256, %v334
  %v336 = vsel %vm85, -1e+30, %v335
  %v337 = vsel %vm77, %v336, -inf
  %338 = vmax.xlane.f32.xlu0 %v337
  %v339 = vpop.xlane.xlu0 %338
  %v340 = vsub.f32 %v336, %v339
  %v341 = vmul.f32 %v340, 1.442695
  %v342 = vpow.pop %v341
  %v343 = vsel %vm77, %v342, 0.0
  %344 = vadd.xlane.f32.xlu0 %v343
  %v345 = vpop.xlane.xlu0 %344
  %v346 = vrcp.pop %v345
  %v347 = vmul.f32 %v342, %v346
  %vm348 = vcmask 130112
  %v349 = vsel %vm348, %v336, -inf
  %350 = vmax.xlane.f32.xlu0 %v349
  %v351 = vpop.xlane.xlu0 %350
  %v352 = vsub.f32 %v336, %v351
  %v353 = vmul.f32 %v352, 1.442695
  %v354 = vpow.pop %v353
  %356 = vrot.lane.b32.xlu0 %v354, 120
  %v357 = vpop.permute.xlu0 %356
  %v359 = vsel %vm77, %v357, 0.0
  %360 = vadd.xlane.f32.xlu0 %v359
  %v361 = vpop.xlane.xlu0 %360
  %v362 = vrcp.pop %v361
  %v363 = vmul.f32 %v354, %v362
  %vm364 = vcmask 195712
  %v365 = vsel %vm364, %v336, -inf
  %366 = vmax.xlane.f32.xlu0 %v365
  %v367 = vpop.xlane.xlu0 %366
  %v368 = vsub.f32 %v336, %v367
  %v369 = vmul.f32 %v368, 1.442695
  %v370 = vpow.pop %v369
  %372 = vrot.lane.b32.xlu0 %v370, 112
  %v373 = vpop.permute.xlu0 %372
  %v375 = vsel %vm77, %v373, 0.0
  %376 = vadd.xlane.f32.xlu0 %v375
  %v377 = vpop.xlane.xlu0 %376
  %v378 = vrcp.pop %v377
  %v379 = vmul.f32 %v370, %v378
  %vm380 = vcmask 261312
  %v381 = vsel %vm380, %v336, -inf
  %382 = vmax.xlane.f32.xlu0 %v381
  %v383 = vpop.xlane.xlu0 %382
  %v384 = vsub.f32 %v336, %v383
  %v385 = vmul.f32 %v384, 1.442695
  %v386 = vpow.pop %v385
  %388 = vrot.lane.b32.xlu0 %v386, 104
  %v389 = vpop.permute.xlu0 %388
  %v391 = vsel %vm77, %v389, 0.0
  %392 = vadd.xlane.f32.xlu0 %v391
  %v393 = vpop.xlane.xlu0 %392
  %v394 = vrcp.pop %v393
  %v395 = vmul.f32 %v386, %v394
  %v396 = vsel %vm77, %v347, %v363
  %v397 = vsel %vm79, %v396, %v379
  %v398 = vsel %vm81, %v397, %v395
  %399 = vrot.lane.b32.xlu0 %v146, 64
  %v400 = vpop.permute.xlu0 %399
  %v402 = vsel %vm79, %v400, 0.0
  %v403 = vsel %vm79, 0.0, %v400
  %v404 = vsel %vm104, %v403, 0.0
  %406 = vrot.lane.b32.xlu0 %v149, 96
  %v407 = vpop.permute.xlu0 %406
  %v409 = vsel %vm104, 0.0, %v407
  %v410 = vsel %vm199, %v409, 0.0
  %v411 = vsel %vm199, 0.0, %v407
  %v412 = vpack.c.bf16 %v398, %v398
  %v413 = vpack.c.bf16 %v404, %v402
  %v414 = vpack.c.bf16 %v411, %v410
  %v416 = vsel %vm104, %v412, 0
  %418 = vmatprep.subr.bf16.mxu0 0
  %419 = vmatpush1.bf16.msra.mxu0 %v413
  %420 = vmatprep.subr.bf16.mxu0 0
  %421 = vmatpush1.bf16.msra.mxu0 %v414
  %422 = vmatprep.subr.bf16.mxu0 0
  %423 = vmatpush1.bf16.msra.mxu0 0
  %424 = vmatprep.subr.bf16.mxu0 0
  %425 = vmatpush1.bf16.msra.mxu0 0
  %426 = vmatprep.subr.bf16.mxu0 0
  %427 = vmatpush1.bf16.msra.mxu0 0
  %428 = vmatprep.subr.bf16.mxu0 0
  %429 = vmatpush1.bf16.msra.mxu0 0
  %430 = vmatprep.subr.bf16.mxu0 0
  %431 = vmatpush1.bf16.msra.mxu0 0
  %432 = vmatprep.subr.bf16.mxu0 0
  %433 = vmatpush1.bf16.msra.mxu0 0
  %434 = vmatprep.subr.bf16.mxu0 0
  %435 = vmatpush1.bf16.msra.mxu0 0
  %436 = vmatprep.subr.bf16.mxu0 0
  %437 = vmatpush1.bf16.msra.mxu0 0
  %438 = vmatprep.subr.bf16.mxu0 0
  %439 = vmatpush1.bf16.msra.mxu0 0
  %440 = vmatprep.subr.bf16.mxu0 0
  %441 = vmatpush1.bf16.msra.mxu0 0
  %442 = vmatprep.subr.bf16.mxu0 0
  %443 = vmatpush1.bf16.msra.mxu0 0
  %444 = vmatprep.subr.bf16.mxu0 0
  %445 = vmatpush1.bf16.msra.mxu0 0
  %446 = vmatprep.subr.bf16.mxu0 0
  %447 = vmatpush1.bf16.msra.mxu0 0
  %448 = vmatprep.subr.bf16.mxu0 0
  %449 = vmatpush1.bf16.msra.mxu0 0
  %450 = vmatprep.mubr.bf16.mxu0 0
  %451 = vmatmul.mubr.bf16.gmra.mrb[0].mxu0 %v416
  %v452 = vpop.f32.mrb[0].mxu0
  %v453 = vadd.f32 0.0, %v452
  %v454 = vpop.f32.mrb[0].mxu0
  %v455 = vpop.f32.mrb[0].mxu0
  %v456 = vpop.f32.mrb[0].mxu0
  %457 = vdwg.mxu0
  %459 = vrot.lane.b32.xlu0 %v453, 96
  %v460 = vpop.permute.xlu0 %459
  %v462 = vpack.c.bf16 %v460, %v453
  %v463 = vld [vmem:[%s6] sm:$0xf]
  %v464 = vld [vmem:[%s6 + $0x4] sm:$0xf]
  %v465 = vld [vmem:[%s6 + $0x8] sm:$0xf]
  %v466 = vld [vmem:[%s6 + $0xc] sm:$0xf]
  %v471 = vunpack.c.l.b16 %v463
  %v472 = vunpack.c.l.b16 %v464
  %v473 = vunpack.c.l.b16 %v465
  %v474 = vunpack.c.l.b16 %v466
  %v475 = vpack.c.b16 %v472, %v471
  %v476 = vpack.c.b16 %v474, %v473
  %v480 = vsel %vm104, %v462, 0
  %482 = vmatprep.subr.bf16.mxu0 0
  %483 = vmatpush1.bf16.msra.mxu0 %v475
  %484 = vmatprep.subr.bf16.mxu0 0
  %485 = vmatpush1.bf16.msra.mxu0 %v476
  %486 = vmatprep.subr.bf16.mxu0 0
  %487 = vmatpush1.bf16.msra.mxu0 0
  %488 = vmatprep.subr.bf16.mxu0 0
  %489 = vmatpush1.bf16.msra.mxu0 0
  %490 = vmatprep.subr.bf16.mxu0 0
  %491 = vmatpush1.bf16.msra.mxu0 0
  %492 = vmatprep.subr.bf16.mxu0 0
  %493 = vmatpush1.bf16.msra.mxu0 0
  %494 = vmatprep.subr.bf16.mxu0 0
  %495 = vmatpush1.bf16.msra.mxu0 0
  %496 = vmatprep.subr.bf16.mxu0 0
  %497 = vmatpush1.bf16.msra.mxu0 0
  %498 = vmatprep.subr.bf16.mxu0 0
  %499 = vmatpush1.bf16.msra.mxu0 0
  %500 = vmatprep.subr.bf16.mxu0 0
  %501 = vmatpush1.bf16.msra.mxu0 0
  %502 = vmatprep.subr.bf16.mxu0 0
  %503 = vmatpush1.bf16.msra.mxu0 0
  %504 = vmatprep.subr.bf16.mxu0 0
  %505 = vmatpush1.bf16.msra.mxu0 0
  %506 = vmatprep.subr.bf16.mxu0 0
  %507 = vmatpush1.bf16.msra.mxu0 0
  %508 = vmatprep.subr.bf16.mxu0 0
  %509 = vmatpush1.bf16.msra.mxu0 0
  %510 = vmatprep.subr.bf16.mxu0 0
  %511 = vmatpush1.bf16.msra.mxu0 0
  %512 = vmatprep.subr.bf16.mxu0 0
  %513 = vmatpush1.bf16.msra.mxu0 0
  %514 = vmatprep.mubr.bf16.mxu0 0
  %515 = vmatmul.mubr.bf16.gmra.mrb[0].mxu0 %v480
  %v516 = vpop.f32.mrb[0].mxu0
  %v517 = vadd.f32 0.0, %v516
  %v518 = vpop.f32.mrb[0].mxu0
  %v519 = vpop.f32.mrb[0].mxu0
  %v520 = vadd.f32 0.0, %v519
  %v521 = vpop.f32.mrb[0].mxu0
  %522 = vdwg.mxu0
  %v523 = vadd.f32 %v59, %v517
  %v524 = vadd.f32 %v64, %v520
  %v525 = vld [vmem:[%s7] sm:$0x1]
  %v526 = vld [vmem:[%s8] sm:$0x1]
  %v527 = vsel %vm104, %v523, 0.0
  %528 = vadd.xlane.f32.xlu0 %v527
  %v529 = vpop.xlane.xlu0 %528
  %v530 = vsel %vm104, %v524, 0.0
  %531 = vadd.xlane.f32.xlu0 %v530
  %v532 = vpop.xlane.xlu0 %531
  %v533 = vrcp.pop 32.0
  %v534 = vmul.f32 %v529, %v533
  %v535 = vmul.f32 %v532, %v533
  %v536 = vsub.f32 %v523, %v534
  %v537 = vsub.f32 %v524, %v535
  %v538 = vmul.f32 %v536, %v536
  %v539 = vmul.f32 %v537, %v537
  %v540 = vsel %vm104, %v538, 0.0
  %541 = vadd.xlane.f32.xlu0 %v540
  %v542 = vpop.xlane.xlu0 %541
  %v543 = vsel %vm104, %v539, 0.0
  %544 = vadd.xlane.f32.xlu0 %v543
  %v545 = vpop.xlane.xlu0 %544
  %v546 = vmul.f32 %v542, %v533
  %v547 = vmul.f32 %v545, %v533
  %v548 = vadd.f32 %v546, 1e-05
  %v549 = vadd.f32 %v547, 1e-05
  %v550 = vrsqrt.pop %v548
  %v551 = vrsqrt.pop %v549
  %v552 = vmul.f32 %v536, %v550
  %v553 = vmul.f32 %v537, %v551
  %v555 = vlaneseq
  %v556 = vshrl.u32 %v555, 7
  %v557 = vsub.s32 0, %v556
  %v558 = vrot.slane %v525, %v557
  %v560 = vmul.f32 %v552, %v558
  %v561 = vmul.f32 %v553, %v558
  %v563 = vlaneseq
  %v564 = vshrl.u32 %v563, 7
  %v565 = vsub.s32 0, %v564
  %v566 = vrot.slane %v526, %v565
  %v568 = vadd.f32 %v560, %v566
  %v569 = vadd.f32 %v561, %v566
  %v570 = vpack.c.bf16 %v569, %v568
  %v571 = vld [vmem:[%s9] sm:$0xf]
  %v572 = vld [vmem:[%s9 + $0x4] sm:$0xf]
  %v573 = vld [vmem:[%s9 + $0x8] sm:$0xf]
  %v574 = vld [vmem:[%s9 + $0xc] sm:$0xf]
  %v575 = vld [vmem:[%s10] sm:$0x1]
  %v577 = vlaneseq
  %v578 = vshrl.u32 %v577, 7
  %v579 = vsub.s32 0, %v578
  %v580 = vrot.slane %v575, %v579
  %v586 = vunpack.c.l.b16 %v571
  %v587 = vunpack.c.l.b16 %v572
  %v588 = vunpack.c.l.b16 %v573
  %v589 = vunpack.c.l.b16 %v574
  %v590 = vpack.c.b16 %v587, %v586
  %v591 = vpack.c.b16 %v589, %v588
  %v595 = vsel %vm104, %v570, 0
  %597 = vmatprep.subr.bf16.mxu0 0
  %598 = vmatpush1.bf16.msra.mxu0 %v590
  %599 = vmatprep.subr.bf16.mxu0 0
  %600 = vmatpush1.bf16.msra.mxu0 %v591
  %601 = vmatprep.subr.bf16.mxu0 0
  %602 = vmatpush1.bf16.msra.mxu0 0
  %603 = vmatprep.subr.bf16.mxu0 0
  %604 = vmatpush1.bf16.msra.mxu0 0
  %605 = vmatprep.subr.bf16.mxu0 0
  %606 = vmatpush1.bf16.msra.mxu0 0
  %607 = vmatprep.subr.bf16.mxu0 0
  %608 = vmatpush1.bf16.msra.mxu0 0
  %609 = vmatprep.subr.bf16.mxu0 0
  %610 = vmatpush1.bf16.msra.mxu0 0
  %611 = vmatprep.subr.bf16.mxu0 0
  %612 = vmatpush1.bf16.msra.mxu0 0
  %613 = vmatprep.subr.bf16.mxu0 0
  %614 = vmatpush1.bf16.msra.mxu0 0
  %615 = vmatprep.subr.bf16.mxu0 0
  %616 = vmatpush1.bf16.msra.mxu0 0
  %617 = vmatprep.subr.bf16.mxu0 0
  %618 = vmatpush1.bf16.msra.mxu0 0
  %619 = vmatprep.subr.bf16.mxu0 0
  %620 = vmatpush1.bf16.msra.mxu0 0
  %621 = vmatprep.subr.bf16.mxu0 0
  %622 = vmatpush1.bf16.msra.mxu0 0
  %623 = vmatprep.subr.bf16.mxu0 0
  %624 = vmatpush1.bf16.msra.mxu0 0
  %625 = vmatprep.subr.bf16.mxu0 0
  %626 = vmatpush1.bf16.msra.mxu0 0
  %627 = vmatprep.subr.bf16.mxu0 0
  %628 = vmatpush1.bf16.msra.mxu0 0
  %629 = vmatprep.mubr.bf16.mxu0 0
  %630 = vmatmul.mubr.bf16.gmra.mrb[0].mxu0 %v595
  %v631 = vpop.f32.mrb[0].mxu0
  %v632 = vadd.f32 %v580, %v631
  %v633 = vpop.f32.mrb[0].mxu0
  %v634 = vpop.f32.mrb[0].mxu0
  %v635 = vadd.f32 %v580, %v634
  %v636 = vpop.f32.mrb[0].mxu0
  %637 = vdwg.mxu0
  %v638 = vmax.f32 %v632, 0.0
  %v639 = vmax.f32 %v635, 0.0
  %v640 = vpack.c.bf16 %v639, %v638
  %v641 = vld [vmem:[%s11] sm:$0xf]
  %v642 = vld [vmem:[%s11 + $0x4] sm:$0xf]
  %v643 = vld [vmem:[%s11 + $0x8] sm:$0xf]
  %v644 = vld [vmem:[%s11 + $0xc] sm:$0xf]
  %v645 = vld [vmem:[%s11 + $0x10] sm:$0xf]
  %v646 = vld [vmem:[%s11 + $0x14] sm:$0xf]
  %v647 = vld [vmem:[%s11 + $0x18] sm:$0xf]
  %v648 = vld [vmem:[%s11 + $0x1c] sm:$0xf]
  %v649 = vld [vmem:[%s12] sm:$0x1]
  %v651 = vlaneseq
  %v652 = vshrl.u32 %v651, 7
  %v653 = vsub.s32 0, %v652
  %v654 = vrot.slane %v649, %v653
  %v664 = vunpack.c.l.b16 %v641
  %v665 = vunpack.c.l.b16 %v642
  %v666 = vunpack.c.l.b16 %v643
  %v667 = vunpack.c.l.b16 %v644
  %v668 = vunpack.c.l.b16 %v645
  %v669 = vunpack.c.l.b16 %v646
  %v670 = vunpack.c.l.b16 %v647
  %v671 = vunpack.c.l.b16 %v648
  %v672 = vpack.c.b16 %v665, %v664
  %v673 = vpack.c.b16 %v667, %v666
  %v674 = vpack.c.b16 %v669, %v668
  %v675 = vpack.c.b16 %v671, %v670
  %v681 = vsel %vm60, %v640, 0
  %683 = vmatprep.subr.bf16.mxu0 0
  %684 = vmatpush1.bf16.msra.mxu0 %v672
  %685 = vmatprep.subr.bf16.mxu0 0
  %686 = vmatpush1.bf16.msra.mxu0 %v673
  %687 = vmatprep.subr.bf16.mxu0 0
  %688 = vmatpush1.bf16.msra.mxu0 %v674
  %689 = vmatprep.subr.bf16.mxu0 0
  %690 = vmatpush1.bf16.msra.mxu0 %v675
  %691 = vmatprep.subr.bf16.mxu0 0
  %692 = vmatpush1.bf16.msra.mxu0 0
  %693 = vmatprep.subr.bf16.mxu0 0
  %694 = vmatpush1.bf16.msra.mxu0 0
  %695 = vmatprep.subr.bf16.mxu0 0
  %696 = vmatpush1.bf16.msra.mxu0 0
  %697 = vmatprep.subr.bf16.mxu0 0
  %698 = vmatpush1.bf16.msra.mxu0 0
  %699 = vmatprep.subr.bf16.mxu0 0
  %700 = vmatpush1.bf16.msra.mxu0 0
  %701 = vmatprep.subr.bf16.mxu0 0
  %702 = vmatpush1.bf16.msra.mxu0 0
  %703 = vmatprep.subr.bf16.mxu0 0
  %704 = vmatpush1.bf16.msra.mxu0 0
  %705 = vmatprep.subr.bf16.mxu0 0
  %706 = vmatpush1.bf16.msra.mxu0 0
  %707 = vmatprep.subr.bf16.mxu0 0
  %708 = vmatpush1.bf16.msra.mxu0 0
  %709 = vmatprep.subr.bf16.mxu0 0
  %710 = vmatpush1.bf16.msra.mxu0 0
  %711 = vmatprep.subr.bf16.mxu0 0
  %712 = vmatpush1.bf16.msra.mxu0 0
  %713 = vmatprep.subr.bf16.mxu0 0
  %714 = vmatpush1.bf16.msra.mxu0 0
  %715 = vmatprep.mubr.bf16.mxu0 0
  %716 = vmatmul.mubr.bf16.gmra.mrb[0].mxu0 %v681
  %v717 = vpop.f32.mrb[0].mxu0
  %v718 = vadd.f32 %v654, %v717
  %v719 = vpop.f32.mrb[0].mxu0
  %v720 = vpop.f32.mrb[0].mxu0
  %v721 = vadd.f32 %v654, %v720
  %v722 = vpop.f32.mrb[0].mxu0
  %723 = vdwg.mxu0
  %v724 = vadd.f32 %v568, %v718
  %v725 = vadd.f32 %v569, %v721
  %v726 = vld [vmem:[%s13] sm:$0x1]
  %v727 = vld [vmem:[%s14] sm:$0x1]
  %v728 = vsel %vm104, %v724, 0.0
  %729 = vadd.xlane.f32.xlu0 %v728
  %v730 = vpop.xlane.xlu0 %729
  %v731 = vsel %vm104, %v725, 0.0
  %732 = vadd.xlane.f32.xlu0 %v731
  %v733 = vpop.xlane.xlu0 %732
  %v734 = vmul.f32 %v730, %v533
  %v735 = vmul.f32 %v733, %v533
  %v736 = vsub.f32 %v724, %v734
  %v737 = vsub.f32 %v725, %v735
  %v738 = vmul.f32 %v736, %v736
  %v739 = vmul.f32 %v737, %v737
  %v740 = vsel %vm104, %v738, 0.0
  %741 = vadd.xlane.f32.xlu0 %v740
  %v742 = vpop.xlane.xlu0 %741
  %v743 = vsel %vm104, %v739, 0.0
  %744 = vadd.xlane.f32.xlu0 %v743
  %v745 = vpop.xlane.xlu0 %744
  %v746 = vmul.f32 %v742, %v533
  %v747 = vmul.f32 %v745, %v533
  %v748 = vadd.f32 %v746, 1e-05
  %v749 = vadd.f32 %v747, 1e-05
  %v750 = vrsqrt.pop %v748
  %v751 = vrsqrt.pop %v749
  %v752 = vmul.f32 %v736, %v750
  %v753 = vmul.f32 %v737, %v751
  %v755 = vlaneseq
  %v756 = vshrl.u32 %v755, 7
  %v757 = vsub.s32 0, %v756
  %v758 = vrot.slane %v726, %v757
  %v760 = vmul.f32 %v752, %v758
  %v761 = vmul.f32 %v753, %v758
  %v763 = vlaneseq
  %v764 = vshrl.u32 %v763, 7
  %v765 = vsub.s32 0, %v764
  %v766 = vrot.slane %v727, %v765
  %v768 = vadd.f32 %v760, %v766
  %v769 = vadd.f32 %v761, %v766
  %771 = vrot.lane.b32.xlu0 %v769, 32
  %v772 = vpop.permute.xlu0 %771
  %v774 = vsel %vm104, %v768, %v772
  %s775 = scalar_lea.vmem %s17, 8
  %776 = vst.msk [vmem:[%s775] sm:$0xff] %vm60, %v774
  %v777 = vpack.c.bf16 %v769, %v768
  %s778 = scalar_lea.vmem %s5, 16
  %v779 = vld [vmem:[%s778] sm:$0xf]
  %v780 = vld [vmem:[%s778 + $0x4] sm:$0xf]
  %v781 = vld [vmem:[%s778 + $0x8] sm:$0xf]
  %v782 = vld [vmem:[%s778 + $0xc] sm:$0xf]
  %v787 = vunpack.c.l.b16 %v779
  %v788 = vunpack.c.l.b16 %v780
  %v789 = vunpack.c.l.b16 %v781
  %v790 = vunpack.c.l.b16 %v782
  %v791 = vpack.c.b16 %v788, %v787
  %v792 = vpack.c.b16 %v790, %v789
  %v796 = vsel %vm104, %v777, 0
  %798 = vmatprep.subr.bf16.mxu0 0
  %799 = vmatpush1.bf16.msra.mxu0 %v791
  %800 = vmatprep.subr.bf16.mxu0 0
  %801 = vmatpush1.bf16.msra.mxu0 %v792
  %802 = vmatprep.subr.bf16.mxu0 0
  %803 = vmatpush1.bf16.msra.mxu0 0
  %804 = vmatprep.subr.bf16.mxu0 0
  %805 = vmatpush1.bf16.msra.mxu0 0
  %806 = vmatprep.subr.bf16.mxu0 0
  %807 = vmatpush1.bf16.msra.mxu0 0
  %808 = vmatprep.subr.bf16.mxu0 0
  %809 = vmatpush1.bf16.msra.mxu0 0
  %810 = vmatprep.subr.bf16.mxu0 0
  %811 = vmatpush1.bf16.msra.mxu0 0
  %812 = vmatprep.subr.bf16.mxu0 0
  %813 = vmatpush1.bf16.msra.mxu0 0
  %814 = vmatprep.subr.bf16.mxu0 0
  %815 = vmatpush1.bf16.msra.mxu0 0
  %816 = vmatprep.subr.bf16.mxu0 0
  %817 = vmatpush1.bf16.msra.mxu0 0
  %818 = vmatprep.subr.bf16.mxu0 0
  %819 = vmatpush1.bf16.msra.mxu0 0
  %820 = vmatprep.subr.bf16.mxu0 0
  %821 = vmatpush1.bf16.msra.mxu0 0
  %822 = vmatprep.subr.bf16.mxu0 0
  %823 = vmatpush1.bf16.msra.mxu0 0
  %824 = vmatprep.subr.bf16.mxu0 0
  %825 = vmatpush1.bf16.msra.mxu0 0
  %826 = vmatprep.subr.bf16.mxu0 0
  %827 = vmatpush1.bf16.msra.mxu0 0
  %828 = vmatprep.subr.bf16.mxu0 0
  %829 = vmatpush1.bf16.msra.mxu0 0
  %830 = vmatprep.mubr.bf16.mxu0 0
  %831 = vmatmul.mubr.bf16.gmra.mrb[0].mxu0 %v796
  %v832 = vpop.f32.mrb[0].mxu0
  %v833 = vadd.f32 0.0, %v832
  %v834 = vpop.f32.mrb[0].mxu0
  %v835 = vpop.f32.mrb[0].mxu0
  %v836 = vadd.f32 0.0, %v835
  %v837 = vpop.f32.mrb[0].mxu0
  %838 = vmatprep.mubr.bf16.mxu0 0
  %839 = vmatmul.mubr.bf16.gmra.mrb[0].mxu0 %v109
  %v840 = vpop.f32.mrb[0].mxu0
  %v841 = vadd.f32 0.0, %v840
  %v842 = vpop.f32.mrb[0].mxu0
  %v843 = vpop.f32.mrb[0].mxu0
  %v844 = vpop.f32.mrb[0].mxu0
  %845 = vdwg.mxu0
  %v846 = vadd.f32 %v833, %v163
  %v847 = vadd.f32 %v833, %v170
  %v848 = vadd.f32 %v836, %v163
  %v849 = vadd.f32 %v836, %v170
  %851 = vrot.lane.b32.xlu0 %v848, 32
  %v852 = vpop.permute.xlu0 %851
  %855 = vrot.lane.b32.xlu0 %v847, 64
  %v856 = vpop.permute.xlu0 %855
  %859 = vrot.lane.b32.xlu0 %v849, 96
  %v860 = vpop.permute.xlu0 %859
  %v862 = vsel %vm104, %v846, %v852
  %v863 = vsel %vm60, %v862, %v856
  %v864 = vsel %vm189, %v863, %v860
  %866 = vrot.lane.b32.xlu0 %v833, 96
  %v867 = vpop.permute.xlu0 %866
  %v869 = vsel %vm79, %v867, 0.0
  %v870 = vsel %vm79, 0.0, %v867
  %v871 = vsel %vm104, %v870, 0.0
  %v872 = vsel %vm104, 0.0, %v836
  %v873 = vsel %vm199, %v872, 0.0
  %v874 = vsel %vm199, 0.0, %v836
  %v875 = vsel %vm60, %v874, 0.0
  %877 = vrot.lane.b32.xlu0 %v841, 96
  %v878 = vpop.permute.xlu0 %877
  %v880 = vsel %vm60, 0.0, %v878
  %v881 = vsel %vm208, %v880, 0.0
  %v882 = vsel %vm208, 0.0, %v878
  %v883 = vsel %vm189, %v882, 0.0
  %v884 = vsel %vm189, 0.0, %v841
  %v885 = vsel %vm213, %v884, 0.0
  %v886 = vsel %vm213, 0.0, %v841
  %v887 = vpack.c.bf16 %v864, %v864
  %v888 = vpack.c.bf16 %v871, %v869
  %v889 = vpack.c.bf16 %v875, %v873
  %v890 = vpack.c.bf16 %v883, %v881
  %v891 = vpack.c.bf16 %v886, %v885
  %892 = vmatprep.subr.bf16.mxu0 0
  %893 = vmatpush1.bf16.xpose.msra.mxu0 %v888
  %894 = vmatprep.subr.bf16.mxu0 0
  %895 = vmatpush1.bf16.xpose.msra.mxu0 %v889
  %896 = vmatprep.subr.bf16.mxu0 0
  %897 = vmatpush1.bf16.xpose.msra.mxu0 %v890
  %898 = vmatprep.subr.bf16.mxu0 0
  %899 = vmatpush1.bf16.xpose.msra.mxu0 %v891
  %900 = vmatprep.subr.bf16.mxu0 0
  %901 = vmatpush1.bf16.xpose.msra.mxu0 0
  %902 = vmatprep.subr.bf16.mxu0 0
  %903 = vmatpush1.bf16.xpose.msra.mxu0 0
  %904 = vmatprep.subr.bf16.mxu0 0
  %905 = vmatpush1.bf16.xpose.msra.mxu0 0
  %906 = vmatprep.subr.bf16.mxu0 0
  %907 = vmatpush1.bf16.xpose.msra.mxu0 0
  %908 = vmatprep.subr.bf16.mxu0 0
  %909 = vmatpush1.bf16.xpose.msra.mxu0 0
  %910 = vmatprep.subr.bf16.mxu0 0
  %911 = vmatpush1.bf16.xpose.msra.mxu0 0
  %912 = vmatprep.subr.bf16.mxu0 0
  %913 = vmatpush1.bf16.xpose.msra.mxu0 0
  %914 = vmatprep.subr.bf16.mxu0 0
  %915 = vmatpush1.bf16.xpose.msra.mxu0 0
  %916 = vmatprep.subr.bf16.mxu0 0
  %917 = vmatpush1.bf16.xpose.msra.mxu0 0
  %918 = vmatprep.subr.bf16.mxu0 0
  %919 = vmatpush1.bf16.xpose.msra.mxu0 0
  %920 = vmatprep.subr.bf16.mxu0 0
  %921 = vmatpush1.bf16.xpose.msra.mxu0 0
  %922 = vmatprep.subr.bf16.mxu0 0
  %923 = vmatpush1.bf16.xpose.msra.mxu0 0
  %924 = vmatprep.mubr.bf16.mxu0 0
  %925 = vmatmul.mubr.bf16.gmra.mrb[0].mxu0 %v887
  %v926 = vpop.f32.mrb[0].mxu0
  %v927 = vadd.f32 0.0, %v926
  %v928 = vpop.f32.mrb[0].mxu0
  %v929 = vpop.f32.mrb[0].mxu0
  %v930 = vpop.f32.mrb[0].mxu0
  %931 = vdwg.mxu0
  %933 = vrot.lane.b32.xlu0 %v927, 95
  %v934 = vpop.permute.xlu0 %933
  %936 = vrot.lane.b32.xlu0 %v927, 127
  %v937 = vpop.permute.xlu0 %936
  %v939 = vsel %vm268, %v934, %v937
  %940 = vrot.lane.b32.xlu0 %v927, 96
  %v941 = vpop.permute.xlu0 %940
  %v943 = vsel %vm270, %v939, %v941
  %944 = vrot.lane.b32.xlu0 %v927, 94
  %v945 = vpop.permute.xlu0 %944
  %947 = vrot.lane.b32.xlu0 %v927, 126
  %v948 = vpop.permute.xlu0 %947
  %v950 = vsel %vm281, %v945, %v948
  %v951 = vsel %vm283, %v950, %v943
  %952 = vrot.lane.b32.xlu0 %v927, 93
  %v953 = vpop.permute.xlu0 %952
  %955 = vrot.lane.b32.xlu0 %v927, 125
  %v956 = vpop.permute.xlu0 %955
  %v958 = vsel %vm291, %v953, %v956
  %v959 = vsel %vm293, %v958, %v951
  %960 = vrot.lane.b32.xlu0 %v927, 92
  %v961 = vpop.permute.xlu0 %960
  %963 = vrot.lane.b32.xlu0 %v927, 124
  %v964 = vpop.permute.xlu0 %963
  %v966 = vsel %vm301, %v961, %v964
  %v967 = vsel %vm303, %v966, %v959
  %968 = vrot.lane.b32.xlu0 %v927, 91
  %v969 = vpop.permute.xlu0 %968
  %971 = vrot.lane.b32.xlu0 %v927, 123
  %v972 = vpop.permute.xlu0 %971
  %v974 = vsel %vm311, %v969, %v972
  %v975 = vsel %vm313, %v974, %v967
  %976 = vrot.lane.b32.xlu0 %v927, 90
  %v977 = vpop.permute.xlu0 %976
  %979 = vrot.lane.b32.xlu0 %v927, 122
  %v980 = vpop.permute.xlu0 %979
  %v982 = vsel %vm321, %v977, %v980
  %v983 = vsel %vm323, %v982, %v975
  %984 = vrot.lane.b32.xlu0 %v927, 89
  %v985 = vpop.permute.xlu0 %984
  %987 = vrot.lane.b32.xlu0 %v927, 121
  %v988 = vpop.permute.xlu0 %987
  %v990 = vsel %vm331, %v985, %v988
  %v991 = vsel %vm333, %v990, %v983
  %v992 = vadd.f32 %v927, %v991
  %v993 = vsel %vm85, -1e+30, %v992
  %v994 = vsel %vm77, %v993, -inf
  %995 = vmax.xlane.f32.xlu0 %v994
  %v996 = vpop.xlane.xlu0 %995
  %v997 = vsub.f32 %v993, %v996
  %v998 = vmul.f32 %v997, 1.442695
  %v999 = vpow.pop %v998
  %v1000 = vsel %vm77, %v999, 0.0
  %1001 = vadd.xlane.f32.xlu0 %v1000
  %v1002 = vpop.xlane.xlu0 %1001
  %v1003 = vrcp.pop %v1002
  %v1004 = vmul.f32 %v999, %v1003
  %v1005 = vsel %vm348, %v993, -inf
  %1006 = vmax.xlane.f32.xlu0 %v1005
  %v1007 = vpop.xlane.xlu0 %1006
  %v1008 = vsub.f32 %v993, %v1007
  %v1009 = vmul.f32 %v1008, 1.442695
  %v1010 = vpow.pop %v1009
  %1012 = vrot.lane.b32.xlu0 %v1010, 120
  %v1013 = vpop.permute.xlu0 %1012
  %v1015 = vsel %vm77, %v1013, 0.0
  %1016 = vadd.xlane.f32.xlu0 %v1015
  %v1017 = vpop.xlane.xlu0 %1016
  %v1018 = vrcp.pop %v1017
  %v1019 = vmul.f32 %v1010, %v1018
  %v1020 = vsel %vm364, %v993, -inf
  %1021 = vmax.xlane.f32.xlu0 %v1020
  %v1022 = vpop.xlane.xlu0 %1021
  %v1023 = vsub.f32 %v993, %v1022
  %v1024 = vmul.f32 %v1023, 1.442695
  %v1025 = vpow.pop %v1024
  %1027 = vrot.lane.b32.xlu0 %v1025, 112
  %v1028 = vpop.permute.xlu0 %1027
  %v1030 = vsel %vm77, %v1028, 0.0
  %1031 = vadd.xlane.f32.xlu0 %v1030
  %v1032 = vpop.xlane.xlu0 %1031
  %v1033 = vrcp.pop %v1032
  %v1034 = vmul.f32 %v1025, %v1033
  %v1035 = vsel %vm380, %v993, -inf
  %1036 = vmax.xlane.f32.xlu0 %v1035
  %v1037 = vpop.xlane.xlu0 %1036
  %v1038 = vsub.f32 %v993, %v1037
  %v1039 = vmul.f32 %v1038, 1.442695
  %v1040 = vpow.pop %v1039
  %1042 = vrot.lane.b32.xlu0 %v1040, 104
  %v1043 = vpop.permute.xlu0 %1042
  %v1045 = vsel %vm77, %v1043, 0.0
  %1046 = vadd.xlane.f32.xlu0 %v1045
  %v1047 = vpop.xlane.xlu0 %1046
  %v1048 = vrcp.pop %v1047
  %v1049 = vmul.f32 %v1040, %v1048
  %v1050 = vsel %vm77, %v1004, %v1019
  %v1051 = vsel %vm79, %v1050, %v1034
  %v1052 = vsel %vm81, %v1051, %v1049
  %1053 = vrot.lane.b32.xlu0 %v833, 64
  %v1054 = vpop.permute.xlu0 %1053
  %v1056 = vsel %vm79, %v1054, 0.0
  %v1057 = vsel %vm79, 0.0, %v1054
  %v1058 = vsel %vm104, %v1057, 0.0
  %1060 = vrot.lane.b32.xlu0 %v836, 96
  %v1061 = vpop.permute.xlu0 %1060
  %v1063 = vsel %vm104, 0.0, %v1061
  %v1064 = vsel %vm199, %v1063, 0.0
  %v1065 = vsel %vm199, 0.0, %v1061
  %v1066 = vpack.c.bf16 %v1052, %v1052
  %v1067 = vpack.c.bf16 %v1058, %v1056
  %v1068 = vpack.c.bf16 %v1065, %v1064
  %v1070 = vsel %vm104, %v1066, 0
  %1072 = vmatprep.subr.bf16.mxu0 0
  %1073 = vmatpush1.bf16.msra.mxu0 %v1067
  %1074 = vmatprep.subr.bf16.mxu0 0
  %1075 = vmatpush1.bf16.msra.mxu0 %v1068
  %1076 = vmatprep.subr.bf16.mxu0 0
  %1077 = vmatpush1.bf16.msra.mxu0 0
  %1078 = vmatprep.subr.bf16.mxu0 0
  %1079 = vmatpush1.bf16.msra.mxu0 0
  %1080 = vmatprep.subr.bf16.mxu0 0
  %1081 = vmatpush1.bf16.msra.mxu0 0
  %1082 = vmatprep.subr.bf16.mxu0 0
  %1083 = vmatpush1.bf16.msra.mxu0 0
  %1084 = vmatprep.subr.bf16.mxu0 0
  %1085 = vmatpush1.bf16.msra.mxu0 0
  %1086 = vmatprep.subr.bf16.mxu0 0
  %1087 = vmatpush1.bf16.msra.mxu0 0
  %1088 = vmatprep.subr.bf16.mxu0 0
  %1089 = vmatpush1.bf16.msra.mxu0 0
  %1090 = vmatprep.subr.bf16.mxu0 0
  %1091 = vmatpush1.bf16.msra.mxu0 0
  %1092 = vmatprep.subr.bf16.mxu0 0
  %1093 = vmatpush1.bf16.msra.mxu0 0
  %1094 = vmatprep.subr.bf16.mxu0 0
  %1095 = vmatpush1.bf16.msra.mxu0 0
  %1096 = vmatprep.subr.bf16.mxu0 0
  %1097 = vmatpush1.bf16.msra.mxu0 0
  %1098 = vmatprep.subr.bf16.mxu0 0
  %1099 = vmatpush1.bf16.msra.mxu0 0
  %1100 = vmatprep.subr.bf16.mxu0 0
  %1101 = vmatpush1.bf16.msra.mxu0 0
  %1102 = vmatprep.subr.bf16.mxu0 0
  %1103 = vmatpush1.bf16.msra.mxu0 0
  %1104 = vmatprep.mubr.bf16.mxu0 0
  %1105 = vmatmul.mubr.bf16.gmra.mrb[0].mxu0 %v1070
  %v1106 = vpop.f32.mrb[0].mxu0
  %v1107 = vadd.f32 0.0, %v1106
  %v1108 = vpop.f32.mrb[0].mxu0
  %v1109 = vpop.f32.mrb[0].mxu0
  %v1110 = vpop.f32.mrb[0].mxu0
  %1111 = vdwg.mxu0
  %1113 = vrot.lane.b32.xlu0 %v1107, 96
  %v1114 = vpop.permute.xlu0 %1113
  %v1116 = vpack.c.bf16 %v1114, %v1107
  %s1117 = scalar_lea.vmem %s6, 16
  %v1118 = vld [vmem:[%s1117] sm:$0xf]
  %v1119 = vld [vmem:[%s1117 + $0x4] sm:$0xf]
  %v1120 = vld [vmem:[%s1117 + $0x8] sm:$0xf]
  %v1121 = vld [vmem:[%s1117 + $0xc] sm:$0xf]
  %v1126 = vunpack.c.l.b16 %v1118
  %v1127 = vunpack.c.l.b16 %v1119
  %v1128 = vunpack.c.l.b16 %v1120
  %v1129 = vunpack.c.l.b16 %v1121
  %v1130 = vpack.c.b16 %v1127, %v1126
  %v1131 = vpack.c.b16 %v1129, %v1128
  %v1135 = vsel %vm104, %v1116, 0
  %1137 = vmatprep.subr.bf16.mxu0 0
  %1138 = vmatpush1.bf16.msra.mxu0 %v1130
  %1139 = vmatprep.subr.bf16.mxu0 0
  %1140 = vmatpush1.bf16.msra.mxu0 %v1131
  %1141 = vmatprep.subr.bf16.mxu0 0
  %1142 = vmatpush1.bf16.msra.mxu0 0
  %1143 = vmatprep.subr.bf16.mxu0 0
  %1144 = vmatpush1.bf16.msra.mxu0 0
  %1145 = vmatprep.subr.bf16.mxu0 0
  %1146 = vmatpush1.bf16.msra.mxu0 0
  %1147 = vmatprep.subr.bf16.mxu0 0
  %1148 = vmatpush1.bf16.msra.mxu0 0
  %1149 = vmatprep.subr.bf16.mxu0 0
  %1150 = vmatpush1.bf16.msra.mxu0 0
  %1151 = vmatprep.subr.bf16.mxu0 0
  %1152 = vmatpush1.bf16.msra.mxu0 0
  %1153 = vmatprep.subr.bf16.mxu0 0
  %1154 = vmatpush1.bf16.msra.mxu0 0
  %1155 = vmatprep.subr.bf16.mxu0 0
  %1156 = vmatpush1.bf16.msra.mxu0 0
  %1157 = vmatprep.subr.bf16.mxu0 0
  %1158 = vmatpush1.bf16.msra.mxu0 0
  %1159 = vmatprep.subr.bf16.mxu0 0
  %1160 = vmatpush1.bf16.msra.mxu0 0
  %1161 = vmatprep.subr.bf16.mxu0 0
  %1162 = vmatpush1.bf16.msra.mxu0 0
  %1163 = vmatprep.subr.bf16.mxu0 0
  %1164 = vmatpush1.bf16.msra.mxu0 0
  %1165 = vmatprep.subr.bf16.mxu0 0
  %1166 = vmatpush1.bf16.msra.mxu0 0
  %1167 = vmatprep.subr.bf16.mxu0 0
  %1168 = vmatpush1.bf16.msra.mxu0 0
  %1169 = vmatprep.mubr.bf16.mxu0 0
  %1170 = vmatmul.mubr.bf16.gmra.mrb[0].mxu0 %v1135
  %v1171 = vpop.f32.mrb[0].mxu0
  %v1172 = vadd.f32 0.0, %v1171
  %v1173 = vpop.f32.mrb[0].mxu0
  %v1174 = vpop.f32.mrb[0].mxu0
  %v1175 = vadd.f32 0.0, %v1174
  %v1176 = vpop.f32.mrb[0].mxu0
  %1177 = vdwg.mxu0
  %v1178 = vadd.f32 %v768, %v1172
  %v1179 = vadd.f32 %v769, %v1175
  %s1180 = scalar_lea.vmem %s7, 1
  %v1181 = vld [vmem:[%s1180] sm:$0x1]
  %s1182 = scalar_lea.vmem %s8, 1
  %v1183 = vld [vmem:[%s1182] sm:$0x1]
  %v1184 = vsel %vm104, %v1178, 0.0
  %1185 = vadd.xlane.f32.xlu0 %v1184
  %v1186 = vpop.xlane.xlu0 %1185
  %v1187 = vsel %vm104, %v1179, 0.0
  %1188 = vadd.xlane.f32.xlu0 %v1187
  %v1189 = vpop.xlane.xlu0 %1188
  %v1190 = vmul.f32 %v1186, %v533
  %v1191 = vmul.f32 %v1189, %v533
  %v1192 = vsub.f32 %v1178, %v1190
  %v1193 = vsub.f32 %v1179, %v1191
  %v1194 = vmul.f32 %v1192, %v1192
  %v1195 = vmul.f32 %v1193, %v1193
  %v1196 = vsel %vm104, %v1194, 0.0
  %1197 = vadd.xlane.f32.xlu0 %v1196
  %v1198 = vpop.xlane.xlu0 %1197
  %v1199 = vsel %vm104, %v1195, 0.0
  %1200 = vadd.xlane.f32.xlu0 %v1199
  %v1201 = vpop.xlane.xlu0 %1200
  %v1202 = vmul.f32 %v1198, %v533
  %v1203 = vmul.f32 %v1201, %v533
  %v1204 = vadd.f32 %v1202, 1e-05
  %v1205 = vadd.f32 %v1203, 1e-05
  %v1206 = vrsqrt.pop %v1204
  %v1207 = vrsqrt.pop %v1205
  %v1208 = vmul.f32 %v1192, %v1206
  %v1209 = vmul.f32 %v1193, %v1207
  %v1211 = vlaneseq
  %v1212 = vshrl.u32 %v1211, 7
  %v1213 = vsub.s32 0, %v1212
  %v1214 = vrot.slane %v1181, %v1213
  %v1216 = vmul.f32 %v1208, %v1214
  %v1217 = vmul.f32 %v1209, %v1214
  %v1219 = vlaneseq
  %v1220 = vshrl.u32 %v1219, 7
  %v1221 = vsub.s32 0, %v1220
  %v1222 = vrot.slane %v1183, %v1221
  %v1224 = vadd.f32 %v1216, %v1222
  %v1225 = vadd.f32 %v1217, %v1222
  %v1226 = vpack.c.bf16 %v1225, %v1224
  %s1227 = scalar_lea.vmem %s9, 16
  %v1228 = vld [vmem:[%s1227] sm:$0xf]
  %v1229 = vld [vmem:[%s1227 + $0x4] sm:$0xf]
  %v1230 = vld [vmem:[%s1227 + $0x8] sm:$0xf]
  %v1231 = vld [vmem:[%s1227 + $0xc] sm:$0xf]
  %s1232 = scalar_lea.vmem %s10, 1
  %v1233 = vld [vmem:[%s1232] sm:$0x1]
  %v1235 = vlaneseq
  %v1236 = vshrl.u32 %v1235, 7
  %v1237 = vsub.s32 0, %v1236
  %v1238 = vrot.slane %v1233, %v1237
  %v1244 = vunpack.c.l.b16 %v1228
  %v1245 = vunpack.c.l.b16 %v1229
  %v1246 = vunpack.c.l.b16 %v1230
  %v1247 = vunpack.c.l.b16 %v1231
  %v1248 = vpack.c.b16 %v1245, %v1244
  %v1249 = vpack.c.b16 %v1247, %v1246
  %v1253 = vsel %vm104, %v1226, 0
  %1255 = vmatprep.subr.bf16.mxu0 0
  %1256 = vmatpush1.bf16.msra.mxu0 %v1248
  %1257 = vmatprep.subr.bf16.mxu0 0
  %1258 = vmatpush1.bf16.msra.mxu0 %v1249
  %1259 = vmatprep.subr.bf16.mxu0 0
  %1260 = vmatpush1.bf16.msra.mxu0 0
  %1261 = vmatprep.subr.bf16.mxu0 0
  %1262 = vmatpush1.bf16.msra.mxu0 0
  %1263 = vmatprep.subr.bf16.mxu0 0
  %1264 = vmatpush1.bf16.msra.mxu0 0
  %1265 = vmatprep.subr.bf16.mxu0 0
  %1266 = vmatpush1.bf16.msra.mxu0 0
  %1267 = vmatprep.subr.bf16.mxu0 0
  %1268 = vmatpush1.bf16.msra.mxu0 0
  %1269 = vmatprep.subr.bf16.mxu0 0
  %1270 = vmatpush1.bf16.msra.mxu0 0
  %1271 = vmatprep.subr.bf16.mxu0 0
  %1272 = vmatpush1.bf16.msra.mxu0 0
  %1273 = vmatprep.subr.bf16.mxu0 0
  %1274 = vmatpush1.bf16.msra.mxu0 0
  %1275 = vmatprep.subr.bf16.mxu0 0
  %1276 = vmatpush1.bf16.msra.mxu0 0
  %1277 = vmatprep.subr.bf16.mxu0 0
  %1278 = vmatpush1.bf16.msra.mxu0 0
  %1279 = vmatprep.subr.bf16.mxu0 0
  %1280 = vmatpush1.bf16.msra.mxu0 0
  %1281 = vmatprep.subr.bf16.mxu0 0
  %1282 = vmatpush1.bf16.msra.mxu0 0
  %1283 = vmatprep.subr.bf16.mxu0 0
  %1284 = vmatpush1.bf16.msra.mxu0 0
  %1285 = vmatprep.subr.bf16.mxu0 0
  %1286 = vmatpush1.bf16.msra.mxu0 0
  %1287 = vmatprep.mubr.bf16.mxu0 0
  %1288 = vmatmul.mubr.bf16.gmra.mrb[0].mxu0 %v1253
  %v1289 = vpop.f32.mrb[0].mxu0
  %v1290 = vadd.f32 %v1238, %v1289
  %v1291 = vpop.f32.mrb[0].mxu0
  %v1292 = vpop.f32.mrb[0].mxu0
  %v1293 = vadd.f32 %v1238, %v1292
  %v1294 = vpop.f32.mrb[0].mxu0
  %1295 = vdwg.mxu0
  %v1296 = vmax.f32 %v1290, 0.0
  %v1297 = vmax.f32 %v1293, 0.0
  %v1298 = vpack.c.bf16 %v1297, %v1296
  %s1299 = scalar_lea.vmem %s11, 32
  %v1300 = vld [vmem:[%s1299] sm:$0xf]
  %v1301 = vld [vmem:[%s1299 + $0x4] sm:$0xf]
  %v1302 = vld [vmem:[%s1299 + $0x8] sm:$0xf]
  %v1303 = vld [vmem:[%s1299 + $0xc] sm:$0xf]
  %v1304 = vld [vmem:[%s1299 + $0x10] sm:$0xf]
  %v1305 = vld [vmem:[%s1299 + $0x14] sm:$0xf]
  %v1306 = vld [vmem:[%s1299 + $0x18] sm:$0xf]
  %v1307 = vld [vmem:[%s1299 + $0x1c] sm:$0xf]
  %s1308 = scalar_lea.vmem %s12, 1
  %v1309 = vld [vmem:[%s1308] sm:$0x1]
  %v1311 = vlaneseq
  %v1312 = vshrl.u32 %v1311, 7
  %v1313 = vsub.s32 0, %v1312
  %v1314 = vrot.slane %v1309, %v1313
  %v1324 = vunpack.c.l.b16 %v1300
  %v1325 = vunpack.c.l.b16 %v1301
  %v1326 = vunpack.c.l.b16 %v1302
  %v1327 = vunpack.c.l.b16 %v1303
  %v1328 = vunpack.c.l.b16 %v1304
  %v1329 = vunpack.c.l.b16 %v1305
  %v1330 = vunpack.c.l.b16 %v1306
  %v1331 = vunpack.c.l.b16 %v1307
  %v1332 = vpack.c.b16 %v1325, %v1324
  %v1333 = vpack.c.b16 %v1327, %v1326
  %v1334 = vpack.c.b16 %v1329, %v1328
  %v1335 = vpack.c.b16 %v1331, %v1330
  %v1341 = vsel %vm60, %v1298, 0
  %1343 = vmatprep.subr.bf16.mxu0 0
  %1344 = vmatpush1.bf16.msra.mxu0 %v1332
  %1345 = vmatprep.subr.bf16.mxu0 0
  %1346 = vmatpush1.bf16.msra.mxu0 %v1333
  %1347 = vmatprep.subr.bf16.mxu0 0
  %1348 = vmatpush1.bf16.msra.mxu0 %v1334
  %1349 = vmatprep.subr.bf16.mxu0 0
  %1350 = vmatpush1.bf16.msra.mxu0 %v1335
  %1351 = vmatprep.subr.bf16.mxu0 0
  %1352 = vmatpush1.bf16.msra.mxu0 0
  %1353 = vmatprep.subr.bf16.mxu0 0
  %1354 = vmatpush1.bf16.msra.mxu0 0
  %1355 = vmatprep.subr.bf16.mxu0 0
  %1356 = vmatpush1.bf16.msra.mxu0 0
  %1357 = vmatprep.subr.bf16.mxu0 0
  %1358 = vmatpush1.bf16.msra.mxu0 0
  %1359 = vmatprep.subr.bf16.mxu0 0
  %1360 = vmatpush1.bf16.msra.mxu0 0
  %1361 = vmatprep.subr.bf16.mxu0 0
  %1362 = vmatpush1.bf16.msra.mxu0 0
  %1363 = vmatprep.subr.bf16.mxu0 0
  %1364 = vmatpush1.bf16.msra.mxu0 0
  %1365 = vmatprep.subr.bf16.mxu0 0
  %1366 = vmatpush1.bf16.msra.mxu0 0
  %1367 = vmatprep.subr.bf16.mxu0 0
  %1368 = vmatpush1.bf16.msra.mxu0 0
  %1369 = vmatprep.subr.bf16.mxu0 0
  %1370 = vmatpush1.bf16.msra.mxu0 0
  %1371 = vmatprep.subr.bf16.mxu0 0
  %1372 = vmatpush1.bf16.msra.mxu0 0
  %1373 = vmatprep.subr.bf16.mxu0 0
  %1374 = vmatpush1.bf16.msra.mxu0 0
  %1375 = vmatprep.mubr.bf16.mxu0 0
  %1376 = vmatmul.mubr.bf16.gmra.mrb[0].mxu0 %v1341
  %v1377 = vpop.f32.mrb[0].mxu0
  %v1378 = vadd.f32 %v1314, %v1377
  %v1379 = vpop.f32.mrb[0].mxu0
  %v1380 = vpop.f32.mrb[0].mxu0
  %v1381 = vadd.f32 %v1314, %v1380
  %v1382 = vpop.f32.mrb[0].mxu0
  %1383 = vdwg.mxu0
  %v1384 = vadd.f32 %v1224, %v1378
  %v1385 = vadd.f32 %v1225, %v1381
  %s1386 = scalar_lea.vmem %s13, 1
  %v1387 = vld [vmem:[%s1386] sm:$0x1]
  %s1388 = scalar_lea.vmem %s14, 1
  %v1389 = vld [vmem:[%s1388] sm:$0x1]
  %v1390 = vsel %vm104, %v1384, 0.0
  %1391 = vadd.xlane.f32.xlu0 %v1390
  %v1392 = vpop.xlane.xlu0 %1391
  %v1393 = vsel %vm104, %v1385, 0.0
  %1394 = vadd.xlane.f32.xlu0 %v1393
  %v1395 = vpop.xlane.xlu0 %1394
  %v1396 = vmul.f32 %v1392, %v533
  %v1397 = vmul.f32 %v1395, %v533
  %v1398 = vsub.f32 %v1384, %v1396
  %v1399 = vsub.f32 %v1385, %v1397
  %v1400 = vmul.f32 %v1398, %v1398
  %v1401 = vmul.f32 %v1399, %v1399
  %v1402 = vsel %vm104, %v1400, 0.0
  %1403 = vadd.xlane.f32.xlu0 %v1402
  %v1404 = vpop.xlane.xlu0 %1403
  %v1405 = vsel %vm104, %v1401, 0.0
  %1406 = vadd.xlane.f32.xlu0 %v1405
  %v1407 = vpop.xlane.xlu0 %1406
  %v1408 = vmul.f32 %v1404, %v533
  %v1409 = vmul.f32 %v1407, %v533
  %v1410 = vadd.f32 %v1408, 1e-05
  %v1411 = vadd.f32 %v1409, 1e-05
  %v1412 = vrsqrt.pop %v1410
  %v1413 = vrsqrt.pop %v1411
  %v1414 = vmul.f32 %v1398, %v1412
  %v1415 = vmul.f32 %v1399, %v1413
  %v1417 = vlaneseq
  %v1418 = vshrl.u32 %v1417, 7
  %v1419 = vsub.s32 0, %v1418
  %v1420 = vrot.slane %v1387, %v1419
  %v1422 = vmul.f32 %v1414, %v1420
  %v1423 = vmul.f32 %v1415, %v1420
  %v1425 = vlaneseq
  %v1426 = vshrl.u32 %v1425, 7
  %v1427 = vsub.s32 0, %v1426
  %v1428 = vrot.slane %v1389, %v1427
  %v1430 = vadd.f32 %v1422, %v1428
  %v1431 = vadd.f32 %v1423, %v1428
  %1433 = vrot.lane.b32.xlu0 %v1431, 32
  %v1434 = vpop.permute.xlu0 %1433
  %v1436 = vsel %vm104, %v1430, %v1434
  %s1437 = scalar_lea.vmem %s17, 16
  %1438 = vst.msk [vmem:[%s1437] sm:$0xff] %vm60, %v1436
  %v1439 = vpack.c.bf16 %v1431, %v1430
  %v1440 = vld [vmem:[%s15] sm:$0xf]
  %v1441 = vld [vmem:[%s15 + $0x4] sm:$0xf]
  %v1442 = vld [vmem:[%s15 + $0x8] sm:$0xf]
  %v1443 = vld [vmem:[%s15 + $0xc] sm:$0xf]
  %v1444 = vld [vmem:[%s16] sm:$0x1]
  %v1446 = vlaneseq
  %v1447 = vshrl.u32 %v1446, 7
  %v1448 = vsub.s32 0, %v1447
  %v1449 = vrot.slane %v1444, %v1448
  %v1455 = vunpack.c.l.b16 %v1440
  %v1456 = vunpack.c.l.b16 %v1441
  %v1457 = vunpack.c.l.b16 %v1442
  %v1458 = vunpack.c.l.b16 %v1443
  %v1459 = vpack.c.b16 %v1456, %v1455
  %v1460 = vpack.c.b16 %v1458, %v1457
  %v1464 = vsel %vm104, %v1439, 0
  %1466 = vmatprep.subr.bf16.mxu0 0
  %1467 = vmatpush1.bf16.msra.mxu0 %v1459
  %1468 = vmatprep.subr.bf16.mxu0 0
  %1469 = vmatpush1.bf16.msra.mxu0 %v1460
  %1470 = vmatprep.subr.bf16.mxu0 0
  %1471 = vmatpush1.bf16.msra.mxu0 0
  %1472 = vmatprep.subr.bf16.mxu0 0
  %1473 = vmatpush1.bf16.msra.mxu0 0
  %1474 = vmatprep.subr.bf16.mxu0 0
  %1475 = vmatpush1.bf16.msra.mxu0 0
  %1476 = vmatprep.subr.bf16.mxu0 0
  %1477 = vmatpush1.bf16.msra.mxu0 0
  %1478 = vmatprep.subr.bf16.mxu0 0
  %1479 = vmatpush1.bf16.msra.mxu0 0
  %1480 = vmatprep.subr.bf16.mxu0 0
  %1481 = vmatpush1.bf16.msra.mxu0 0
  %1482 = vmatprep.subr.bf16.mxu0 0
  %1483 = vmatpush1.bf16.msra.mxu0 0
  %1484 = vmatprep.subr.bf16.mxu0 0
  %1485 = vmatpush1.bf16.msra.mxu0 0
  %1486 = vmatprep.subr.bf16.mxu0 0
  %1487 = vmatpush1.bf16.msra.mxu0 0
  %1488 = vmatprep.subr.bf16.mxu0 0
  %1489 = vmatpush1.bf16.msra.mxu0 0
  %1490 = vmatprep.subr.bf16.mxu0 0
  %1491 = vmatpush1.bf16.msra.mxu0 0
  %1492 = vmatprep.subr.bf16.mxu0 0
  %1493 = vmatpush1.bf16.msra.mxu0 0
  %1494 = vmatprep.subr.bf16.mxu0 0
  %1495 = vmatpush1.bf16.msra.mxu0 0
  %1496 = vmatprep.subr.bf16.mxu0 0
  %1497 = vmatpush1.bf16.msra.mxu0 0
  %1498 = vmatprep.mubr.bf16.mxu0 0
  %1499 = vmatmul.mubr.bf16.gmra.mrb[0].mxu0 %v1464
  %v1500 = vpop.f32.mrb[0].mxu0
  %v1501 = vadd.f32 %v1449, %v1500
  %v1502 = vpop.f32.mrb[0].mxu0
  %v1503 = vpop.f32.mrb[0].mxu0
  %v1504 = vadd.f32 %v1449, %v1503
  %v1505 = vpop.f32.mrb[0].mxu0
  %1506 = vdwg.mxu0
  %1507 = vmax.xlane.f32.xlu0 %v1501
  %v1508 = vpop.xlane.xlu0 %1507
  %1509 = vmax.xlane.f32.xlu0 %v1504
  %v1510 = vpop.xlane.xlu0 %1509
  %v1511 = vsub.f32 %v1501, %v1508
  %v1512 = vsub.f32 %v1504, %v1510
  %v1513 = vmul.f32 %v1511, 1.442695
  %v1514 = vpow.pop %v1513
  %v1515 = vmul.f32 %v1512, 1.442695
  %v1516 = vpow.pop %v1515
  %1517 = vadd.xlane.f32.xlu0 %v1514
  %v1518 = vpop.xlane.xlu0 %1517
  %1519 = vadd.xlane.f32.xlu0 %v1516
  %v1520 = vpop.xlane.xlu0 %1519
  %v1521 = vlog2.pop %v1518
  %v1522 = vmul.f32 %v1521, 0.6931472
  %v1523 = vlog2.pop %v1520
  %v1524 = vmul.f32 %v1523, 0.6931472
  %v1525 = vadd.f32 %v1508, %v1522
  %v1526 = vadd.f32 %v1510, %v1524
  %v1527 = vld [vmem:[%s2] sm:$0xff]
  %1528 = vrot.lane.b32.xlu0 %v1527, 127
  %v1529 = vpop.permute.xlu0 %1528
  %1530 = vset.pattern.permute.xlu0 0
  %1531 = vperm.xlu0 %1530, %v1527
  %v1532 = vpop.permute.xlu0 %1531
  %1533 = vset.pattern.permute.xlu0 0
  %1534 = vperm.xlu0 %1533, %v1529
  %v1535 = vpop.permute.xlu0 %1534
  %vm1536 = vcmp.eq.s32.totalorder %v70, %v1532
  %vm1537 = vcmp.eq.s32.totalorder %v70, %v1535
  %v1538 = vsel %vm1536, %v1501, 0.0
  %v1539 = vsel %vm1537, %v1504, 0.0
  %1540 = vadd.xlane.f32.xlu0 %v1538
  %v1541 = vpop.xlane.xlu0 %1540
  %1542 = vadd.xlane.f32.xlu0 %v1539
  %v1543 = vpop.xlane.xlu0 %1542
  %v1544 = vsub.f32 %v1525, %v1541
  %v1545 = vsub.f32 %v1526, %v1543
  %vm1546 = vcmask 7168
  %v1547 = vsel %vm1546, %v1544, %v1545
  %vm1548 = vcmask 15360
  %v1549 = vsel %vm1548, %v1547, 0.0
  %1550 = vst [vmem:[%s18] sm:$0xff] %v1549
  // Predicated region
  $region70: #{mem_transformer_forward.1} parent=0 // pred_check
    _
  $region71: #{mem_transformer_forward.1} parent=0 // pred_check_branch
    %1552 = sbr.rel (0) target = $region73
  $region72: #{mem_transformer_forward.1} parent=0 // pred_region
    _
  $region73: #{mem_transformer_forward.1} parent=0 // pred_fallthru
    _
  // Predicated region
  $region74: #{mem_transformer_forward.1} parent=0 // pred_check
    _
  $region75: #{mem_transformer_forward.1} parent=0 // pred_check_branch
    %1554 = sbr.rel (0) target = $region77
  $region76: #{mem_transformer_forward.1} parent=0 // pred_region
    _
  $region77: #{mem_transformer_forward.1} parent=0 // pred_fallthru
    _
  // Predicated region
  $region78: #{mem_transformer_forward.1} parent=0 // pred_check
    _
  $region79: #{mem_transformer_forward.1} parent=0 // pred_check_branch
    %1556 = sbr.rel (0) target = $region81
  $region80: #{mem_transformer_forward.1} parent=0 // pred_region
    _
  $region81: #{mem_transformer_forward.1} parent=0 // pred_fallthru
    _
  // Predicated region
  $region82: #{mem_transformer_forward.1} parent=0 // pred_check
    _
  $region83: #{mem_transformer_forward.1} parent=0 // pred_check_branch
    %1558 = sbr.rel (0) target = $region85
  $region84: #{mem_transformer_forward.1} parent=0 // pred_region
    _
  $region85: #{mem_transformer_forward.1} parent=0 // pred_fallthru
    _

</llo_original>
